<compile_context>
chip_gen: v7x
topology: tpu7x:2x2x1
jax: 0.10.0
libtpu: 0.0.40
codegen_flags: <defaults>
</compile_context>

<pallas_src>
import math

import jax
import jax.numpy as jnp
from jax import lax
from jax.experimental import pallas as pl
from jax.experimental.pallas import tpu as pltpu

# ----------------------------- config (small) -----------------------------
B = 2          # batch
T = 8          # n_ctx / sequence length
C = 32         # n_embd
H = 4          # n_head
DH = C // H    # head dim
BT = B * T     # flattened rows
EPS = 1e-5     # layer_norm_epsilon
SCALE = False  # Attention scale flag (Block default)
LANES = 128    # lane-dense width for param slab / output slab


def _gelu(x):
    # matches the PyTorch tanh-approximation gelu in the reference module
    return 0.5 * x * (1.0 + jnp.tanh(math.sqrt(2.0 / math.pi)
                                     * (x + 0.044715 * x * x * x)))


def _layernorm(x, g, b):
    # PyTorch nn.LayerNorm: biased variance over the last dim
    mean = jnp.mean(x, axis=-1, keepdims=True)
    var = jnp.mean((x - mean) ** 2, axis=-1, keepdims=True)
    return (x - mean) * lax.rsqrt(var + EPS) * g + b


# ------------------------------- the kernel -------------------------------
# Packed parameter slab layout (f32, (8, 128), every row starts at lane 0):
#   row 0: ln1_gamma (C)      row 1: ln1_beta (C)
#   row 2: ln2_gamma (C)      row 3: ln2_beta (C)
#   row 4: b_aproj   (C)      row 5: b_mproj  (C)
#   row 6: b_fc      (4C)     row 7: b_attn   (3C)
def block_kernel(x_ref, prm_ref, w_attn_ref, w_aproj_ref, w_fc_ref,
                 w_mproj_ref, out_ref):
    x = x_ref[...]                                        # (BT, C) f32
    prm = prm_ref[...]                                    # (8, 128) f32

    ln1_g = prm[0:1, :C]
    ln1_b = prm[1:2, :C]
    ln2_g = prm[2:3, :C]
    ln2_b = prm[3:4, :C]
    b_aproj = prm[4:5, :C]
    b_mproj = prm[5:6, :C]
    b_fc = prm[6:7, :4 * C]
    b_attn = prm[7:8, :3 * C]

    # ---- ln_1 (f32) ----
    h = _layernorm(x, ln1_g, ln1_b)                       # (BT, C)

    # ---- c_attn: bf16 operands, f32 accumulation ----
    qkv = jnp.dot(h.astype(jnp.bfloat16), w_attn_ref[...],
                  preferred_element_type=jnp.float32) + b_attn   # (BT, 3C) f32

    q = qkv[:, 0 * C:1 * C]                               # (BT, C)
    k = qkv[:, 1 * C:2 * C]
    v = qkv[:, 2 * C:3 * C]

    # additive causal mask, built & broadcast ONCE (reused across heads)
    row = lax.broadcasted_iota(jnp.int32, (T, T), 0)
    col = lax.broadcasted_iota(jnp.int32, (T, T), 1)
    addmask = jnp.broadcast_to(
        jnp.where(row >= col, 0.0, -1e18).astype(jnp.float32)[None, :, :],
        (B, T, T))                                        # (B, T, T)

    w_aproj = w_aproj_ref[...]                            # (C, C) bf16

    # ---- attention: static head loop (H=4), batched over B, head-merge
    #      folded directly into the output projection (no concat).
    a_acc = None
    for hh in range(H):
        sl = slice(hh * DH, (hh + 1) * DH)
        qh = q[:, sl].reshape(B, T, DH).astype(jnp.bfloat16)
        kh = k[:, sl].reshape(B, T, DH).astype(jnp.bfloat16)
        vh = v[:, sl].reshape(B, T, DH).astype(jnp.bfloat16)

        s = jnp.einsum('bqd,bkd->bqk', qh, kh,
                       preferred_element_type=jnp.float32)      # (B, T, T)
        if SCALE:
            s = s * (1.0 / math.sqrt(DH))
        s = s + addmask
        s = s - jnp.max(s, axis=-1, keepdims=True)
        p = jnp.exp(s)
        p = p * pl.reciprocal(jnp.sum(p, axis=-1, keepdims=True), approx=True)

        ho = jnp.einsum('bqk,bkd->bqd', p.astype(jnp.bfloat16), vh,
                        preferred_element_type=jnp.float32)     # (B, T, DH)
        part = jnp.dot(ho.reshape(BT, DH).astype(jnp.bfloat16),
                       w_aproj[sl, :],                          # (DH, C) bf16
                       preferred_element_type=jnp.float32)      # (BT, C)
        a_acc = part if a_acc is None else a_acc + part

    a = a_acc + b_aproj
    x1 = x + a                                                  # residual 1

    # ---- ln_2 ----
    h2 = _layernorm(x1, ln2_g, ln2_b)

    # ---- MLP: c_fc -> gelu -> c_proj + residual (bf16 matmul operands) ----
    m = jnp.dot(h2.astype(jnp.bfloat16), w_fc_ref[...],
                preferred_element_type=jnp.float32) + b_fc
    m = _gelu(m)
    m = jnp.dot(m.astype(jnp.bfloat16), w_mproj_ref[...],
                preferred_element_type=jnp.float32) + b_mproj
    y = x1 + m                                                  # residual 2

    # ---- single lane-dense (BT, 128) store: [y | k | v | pad] ----
    # q is never needed by the wrapper -> do not write it back to HBM.
    pad = jnp.zeros((BT, C), jnp.float32)
    out_ref[...] = jnp.concatenate([y, k, v, pad], axis=-1)


# ------------------------------- the wrapper -------------------------------
def _full2d(shape):
    return pl.BlockSpec(shape, lambda i: (0, 0))


def _pack_params(vectors):
    rows = []
    for vec in vectors:
        vec2 = vec.reshape(1, -1).astype(jnp.float32)
        rows.append(jnp.pad(vec2, ((0, 0), (0, LANES - vec2.shape[1]))))
    return jnp.concatenate(rows, axis=0)                  # (8, 128)


@jax.jit
def gpt2_block(x, params):
    (ln1_g, ln1_b, w_attn, b_attn, w_aproj, b_aproj,
     ln2_g, ln2_b, w_fc, b_fc, w_mproj, b_mproj) = params

    x2 = x.reshape(BT, C)    # free XLA reshape; kernel sees one flat slab
    prm = _pack_params([ln1_g, ln1_b, ln2_g, ln2_b,
                        b_aproj, b_mproj, b_fc, b_attn])

    out = pl.pallas_call(
        block_kernel,
        out_shape=jax.ShapeDtypeStruct((BT, 4 * C), jnp.float32),
        grid_spec=pltpu.PrefetchScalarGridSpec(
            num_scalar_prefetch=0,
            grid=(1,),                                    # single grid step
            in_specs=[
                _full2d((BT, C)),                         # x (flattened)
                _full2d((8, LANES)),                      # packed LN/bias slab
                _full2d((C, 3 * C)),                      # c_attn W   (bf16)
                _full2d((C, C)),                          # attn c_proj W (bf16)
                _full2d((C, 4 * C)),                      # c_fc W     (bf16)
                _full2d((4 * C, C)),                      # mlp c_proj W (bf16)
            ],
            out_specs=_full2d((BT, 4 * C)),               # lane-dense 128 slab
        ),
        compiler_params=pltpu.CompilerParams(
            dimension_semantics=("arbitrary",)),
    )(x2, prm,
      w_attn.astype(jnp.bfloat16), w_aproj.astype(jnp.bfloat16),
      w_fc.astype(jnp.bfloat16), w_mproj.astype(jnp.bfloat16))

    # slice the slab in the wrapper (pure XLA glue)
    y = out[:, 0 * C:1 * C].reshape(B, T, C)
    k = out[:, 1 * C:2 * C].reshape(B, T, H, DH).transpose(0, 2, 1, 3)  # (B,H,T,DH)
    v = out[:, 2 * C:3 * C].reshape(B, T, H, DH).transpose(0, 2, 1, 3)
    present = jnp.stack((k, v))                                         # (2,B,H,T,DH)
    return y, present


# --------------------------- pure-JAX reference ---------------------------
def _reference(x, params):
    (ln1_g, ln1_b, w_attn, b_attn, w_aproj, b_aproj,
     ln2_g, ln2_b, w_fc, b_fc, w_mproj, b_mproj) = params
    h = _layernorm(x, ln1_g, ln1_b)
    qkv = h @ w_attn + b_attn
    q, k, v = jnp.split(qkv, 3, axis=-1)
    q = q.reshape(B, T, H, DH).transpose(0, 2, 1, 3)
    k = k.reshape(B, T, H, DH).transpose(0, 2, 1, 3)
    v = v.reshape(B, T, H, DH).transpose(0, 2, 1, 3)
    w = jnp.einsum("bhqd,bhkd->bhqk", q, k)
    if SCALE:
        w = w / math.sqrt(DH)
    causal = jnp.tril(jnp.ones((T, T)))
    w = w * causal - 1e18 * (1.0 - causal)
    w = jax.nn.softmax(w, axis=-1)
    a = jnp.einsum("bhqk,bhkd->bhqd", w, v).transpose(0, 2, 1, 3).reshape(B, T, C)
    a = a @ w_aproj + b_aproj
    x = x + a
    m = _gelu(_layernorm(x, ln2_g, ln2_b) @ w_fc + b_fc) @ w_mproj + b_mproj
    return x + m, k, v


# ---------------------------------- main ----------------------------------
if __name__ == "__main__":
    key = jax.random.PRNGKey(0)
    keys = jax.random.split(key, 16)

    x = jax.random.normal(keys[0], (B, T, C), dtype=jnp.float32)

    # deterministic synthetic parameters (GPT-2-ish init, non-trivial biases
    # and LN params so the packed-slab wiring is actually exercised)
    ln1_g = 1.0 + 0.1 * jax.random.normal(keys[5], (1, C), jnp.float32)
    ln1_b = 0.1 * jax.random.normal(keys[6], (1, C), jnp.float32)
    ln2_g = 1.0 + 0.1 * jax.random.normal(keys[7], (1, C), jnp.float32)
    ln2_b = 0.1 * jax.random.normal(keys[8], (1, C), jnp.float32)
    w_attn = 0.02 * jax.random.normal(keys[1], (C, 3 * C), jnp.float32)
    b_attn = 0.02 * jax.random.normal(keys[9], (1, 3 * C), jnp.float32)
    w_aproj = 0.02 * jax.random.normal(keys[2], (C, C), jnp.float32)
    b_aproj = 0.02 * jax.random.normal(keys[10], (1, C), jnp.float32)
    w_fc = 0.02 * jax.random.normal(keys[3], (C, 4 * C), jnp.float32)
    b_fc = 0.02 * jax.random.normal(keys[11], (1, 4 * C), jnp.float32)
    w_mproj = 0.02 * jax.random.normal(keys[4], (4 * C, C), jnp.float32)
    b_mproj = 0.02 * jax.random.normal(keys[12], (1, C), jnp.float32)

    params = (ln1_g, ln1_b, w_attn, b_attn, w_aproj, b_aproj,
              ln2_g, ln2_b, w_fc, b_fc, w_mproj, b_mproj)

    out, present = gpt2_block(x, params)
    out = jax.block_until_ready(out)
    present = jax.block_until_ready(present)

    # verify against pure-JAX f32 reference (1D param views for broadcasting).
    # tolerance accounts for bf16 matmul operands + approx reciprocal.
    ref_params = tuple(p[0] if p.ndim == 2 and p.shape[0] == 1 else p
                       for p in params)
    ref, k_ref, v_ref = _reference(x, ref_params)
    assert out.shape == (B, T, C)
    assert present.shape == (2, B, H, T, DH)
    assert jnp.allclose(out, ref, atol=1e-2, rtol=1e-2), "mismatch vs reference (y)"
    assert jnp.allclose(present[0], k_ref, atol=1e-2, rtol=1e-2), "mismatch (k)"
    assert jnp.allclose(present[1], v_ref, atol=1e-2, rtol=1e-2), "mismatch (v)"

    print("KERNEL_OK")
</pallas_src>

<mosaic_0001>
module attributes {stable_mosaic.version = 11 : i64} {
  func.func @block_kernel(%arg0: i32, %arg1: memref<16x32xf32, #tpu.memory_space<vmem>>, %arg2: memref<8x128xf32, #tpu.memory_space<vmem>>, %arg3: memref<32x96xbf16, #tpu.memory_space<vmem>>, %arg4: memref<32x32xbf16, #tpu.memory_space<vmem>>, %arg5: memref<32x128xbf16, #tpu.memory_space<vmem>>, %arg6: memref<128x32xbf16, #tpu.memory_space<vmem>>, %arg7: memref<16x128xf32, #tpu.memory_space<vmem>>) attributes {dimension_semantics = [#tpu.dimension_semantics<arbitrary>], iteration_bounds = array<i64: 1>, scalar_prefetch = 0 : i64, scratch_operands = 0 : i64, tpu.core_type = #tpu.core_type<tc>, window_params = [{pipeline_mode = #tpu.pipeline_mode<synchronous>, transform_indices = @transform_0, window_bounds = array<i64: 16, 32>}, {pipeline_mode = #tpu.pipeline_mode<synchronous>, transform_indices = @transform_1, window_bounds = array<i64: 8, 128>}, {pipeline_mode = #tpu.pipeline_mode<synchronous>, transform_indices = @transform_2, window_bounds = array<i64: 32, 96>}, {pipeline_mode = #tpu.pipeline_mode<synchronous>, transform_indices = @transform_3, window_bounds = array<i64: 32, 32>}, {pipeline_mode = #tpu.pipeline_mode<synchronous>, transform_indices = @transform_4, window_bounds = array<i64: 32, 128>}, {pipeline_mode = #tpu.pipeline_mode<synchronous>, transform_indices = @transform_5, window_bounds = array<i64: 128, 32>}, {pipeline_mode = #tpu.pipeline_mode<synchronous>, transform_indices = @transform_6, window_bounds = array<i64: 16, 128>}]} {
    %c0 = arith.constant 0 : index
    %c0_0 = arith.constant 0 : index
    %0 = vector.load %arg1[%c0, %c0_0] : memref<16x32xf32, #tpu.memory_space<vmem>>, vector<16x32xf32>
    %c0_1 = arith.constant 0 : index
    %c0_2 = arith.constant 0 : index
    %1 = vector.load %arg2[%c0_1, %c0_2] : memref<8x128xf32, #tpu.memory_space<vmem>>, vector<8x128xf32>
    %2 = vector.extract_strided_slice %1 {offsets = [0, 0], sizes = [1, 32], strides = [1, 1]} : vector<8x128xf32> to vector<1x32xf32>
    %3 = vector.extract_strided_slice %1 {offsets = [1, 0], sizes = [1, 32], strides = [1, 1]} : vector<8x128xf32> to vector<1x32xf32>
    %4 = vector.extract_strided_slice %1 {offsets = [2, 0], sizes = [1, 32], strides = [1, 1]} : vector<8x128xf32> to vector<1x32xf32>
    %5 = vector.extract_strided_slice %1 {offsets = [3, 0], sizes = [1, 32], strides = [1, 1]} : vector<8x128xf32> to vector<1x32xf32>
    %6 = vector.extract_strided_slice %1 {offsets = [4, 0], sizes = [1, 32], strides = [1, 1]} : vector<8x128xf32> to vector<1x32xf32>
    %7 = vector.extract_strided_slice %1 {offsets = [5, 0], sizes = [1, 32], strides = [1, 1]} : vector<8x128xf32> to vector<1x32xf32>
    %8 = vector.extract_strided_slice %1 {offsets = [6, 0], sizes = [1, 128], strides = [1, 1]} : vector<8x128xf32> to vector<1x128xf32>
    %9 = vector.extract_strided_slice %1 {offsets = [7, 0], sizes = [1, 96], strides = [1, 1]} : vector<8x128xf32> to vector<1x96xf32>
    %cst = arith.constant dense<0.000000e+00> : vector<16xf32>
    %10 = vector.multi_reduction <add>, %0, %cst [1] : vector<16x32xf32> to vector<16xf32>
    %11 = vector.shape_cast %10 : vector<16xf32> to vector<16x1xf32>
    %cst_3 = arith.constant 3.200000e+01 : f32
    %12 = vector.broadcast %cst_3 : f32 to vector<16x1xf32>
    %13 = arith.divf %11, %12 : vector<16x1xf32>
    %14 = vector.broadcast %13 : vector<16x1xf32> to vector<16x32xf32>
    %15 = arith.subf %0, %14 : vector<16x32xf32>
    %16 = arith.mulf %15, %15 : vector<16x32xf32>
    %cst_4 = arith.constant dense<0.000000e+00> : vector<16xf32>
    %17 = vector.multi_reduction <add>, %16, %cst_4 [1] : vector<16x32xf32> to vector<16xf32>
    %18 = vector.shape_cast %17 : vector<16xf32> to vector<16x1xf32>
    %cst_5 = arith.constant 3.200000e+01 : f32
    %19 = vector.broadcast %cst_5 : f32 to vector<16x1xf32>
    %20 = arith.divf %18, %19 : vector<16x1xf32>
    %21 = vector.broadcast %13 : vector<16x1xf32> to vector<16x32xf32>
    %22 = arith.subf %0, %21 : vector<16x32xf32>
    %cst_6 = arith.constant 9.99999974E-6 : f32
    %23 = vector.broadcast %cst_6 : f32 to vector<16x1xf32>
    %24 = arith.addf %20, %23 : vector<16x1xf32>
    %25 = math.rsqrt %24 : vector<16x1xf32>
    %26 = vector.broadcast %25 : vector<16x1xf32> to vector<16x32xf32>
    %27 = arith.mulf %22, %26 : vector<16x32xf32>
    %28 = vector.broadcast %2 : vector<1x32xf32> to vector<16x32xf32>
    %29 = arith.mulf %27, %28 : vector<16x32xf32>
    %30 = vector.broadcast %3 : vector<1x32xf32> to vector<16x32xf32>
    %31 = arith.addf %29, %30 : vector<16x32xf32>
    %32 = arith.truncf %31 : vector<16x32xf32> to vector<16x32xbf16>
    %c0_7 = arith.constant 0 : index
    %c0_8 = arith.constant 0 : index
    %33 = vector.load %arg3[%c0_7, %c0_8] : memref<32x96xbf16, #tpu.memory_space<vmem>>, vector<32x96xbf16>
    %cst_9 = arith.constant dense<0.000000e+00> : vector<16x96xf32>
    %34 = tpu.matmul %32, %33, %cst_9 {dimension_numbers = #tpu.dot_dimension_numbers<[1], [0], [0], [1], [0, 0, 1, 1], [], []>} : vector<16x32xbf16>, vector<32x96xbf16>, vector<16x96xf32> -> vector<16x96xf32>
    %35 = vector.broadcast %9 : vector<1x96xf32> to vector<16x96xf32>
    %36 = arith.addf %34, %35 : vector<16x96xf32>
    %37 = vector.extract_strided_slice %36 {offsets = [0, 0], sizes = [16, 32], strides = [1, 1]} : vector<16x96xf32> to vector<16x32xf32>
    %38 = vector.extract_strided_slice %36 {offsets = [0, 32], sizes = [16, 32], strides = [1, 1]} : vector<16x96xf32> to vector<16x32xf32>
    %39 = vector.extract_strided_slice %36 {offsets = [0, 64], sizes = [16, 32], strides = [1, 1]} : vector<16x96xf32> to vector<16x32xf32>
    %40 = tpu.iota {dimensions = array<i32: 0>} : vector<8x8xi32>
    %41 = tpu.iota {dimensions = array<i32: 1>} : vector<8x8xi32>
    %42 = arith.cmpi sge, %40, %41 : vector<8x8xi32>
    %cst_10 = arith.constant 0.000000e+00 : f32
    %cst_11 = arith.constant -9.99999984E+17 : f32
    %43 = vector.broadcast %cst_10 : f32 to vector<8x8xf32>
    %44 = vector.broadcast %cst_11 : f32 to vector<8x8xf32>
    %45 = arith.select %42, %43, %44 : vector<8x8xi1>, vector<8x8xf32>
    %46 = vector.shape_cast %45 : vector<8x8xf32> to vector<1x8x8xf32>
    %47 = vector.shape_cast %46 : vector<1x8x8xf32> to vector<1x8x8xf32>
    %48 = vector.broadcast %47 : vector<1x8x8xf32> to vector<2x8x8xf32>
    %c0_12 = arith.constant 0 : index
    %c0_13 = arith.constant 0 : index
    %49 = vector.load %arg4[%c0_12, %c0_13] : memref<32x32xbf16, #tpu.memory_space<vmem>>, vector<32x32xbf16>
    %50 = vector.extract_strided_slice %37 {offsets = [0, 0], sizes = [16, 8], strides = [1, 1]} : vector<16x32xf32> to vector<16x8xf32>
    %51 = vector.shape_cast %50 : vector<16x8xf32> to vector<2x8x8xf32>
    %52 = arith.truncf %51 : vector<2x8x8xf32> to vector<2x8x8xbf16>
    %53 = vector.extract_strided_slice %38 {offsets = [0, 0], sizes = [16, 8], strides = [1, 1]} : vector<16x32xf32> to vector<16x8xf32>
    %54 = vector.shape_cast %53 : vector<16x8xf32> to vector<2x8x8xf32>
    %55 = arith.truncf %54 : vector<2x8x8xf32> to vector<2x8x8xbf16>
    %56 = vector.extract_strided_slice %39 {offsets = [0, 0], sizes = [16, 8], strides = [1, 1]} : vector<16x32xf32> to vector<16x8xf32>
    %57 = vector.shape_cast %56 : vector<16x8xf32> to vector<2x8x8xf32>
    %58 = arith.truncf %57 : vector<2x8x8xf32> to vector<2x8x8xbf16>
    "tpu.trace_start"() <{level = 10 : i32, message = "bqd,bkd->bqk"}> : () -> ()
    %cst_14 = arith.constant dense<0.000000e+00> : vector<2x8x8xf32>
    %59 = tpu.matmul %52, %55, %cst_14 {dimension_numbers = #tpu.dot_dimension_numbers<[2], [2], [1], [1], [0, 0, 0, 1, 1, 1], [0], [0]>} : vector<2x8x8xbf16>, vector<2x8x8xbf16>, vector<2x8x8xf32> -> vector<2x8x8xf32>
    "tpu.trace_stop"() : () -> ()
    %60 = arith.addf %59, %48 : vector<2x8x8xf32>
    %cst_15 = arith.constant dense<0xFF800000> : vector<2x8xf32>
    %61 = vector.multi_reduction <maximumf>, %60, %cst_15 [2] : vector<2x8x8xf32> to vector<2x8xf32>
    %62 = vector.shape_cast %61 : vector<2x8xf32> to vector<2x8x1xf32>
    %63 = vector.broadcast %62 : vector<2x8x1xf32> to vector<2x8x8xf32>
    %64 = arith.subf %60, %63 : vector<2x8x8xf32>
    %65 = math.exp %64 : vector<2x8x8xf32>
    %cst_16 = arith.constant dense<0.000000e+00> : vector<2x8xf32>
    %66 = vector.multi_reduction <add>, %65, %cst_16 [2] : vector<2x8x8xf32> to vector<2x8xf32>
    %67 = vector.shape_cast %66 : vector<2x8xf32> to vector<2x8x1xf32>
    %68 = tpu.reciprocal %67 {approx = true} : vector<2x8x1xf32> -> vector<2x8x1xf32>
    %69 = vector.broadcast %68 : vector<2x8x1xf32> to vector<2x8x8xf32>
    %70 = arith.mulf %65, %69 : vector<2x8x8xf32>
    %71 = arith.truncf %70 : vector<2x8x8xf32> to vector<2x8x8xbf16>
    "tpu.trace_start"() <{level = 10 : i32, message = "bqk,bkd->bqd"}> : () -> ()
    %cst_17 = arith.constant dense<0.000000e+00> : vector<2x8x8xf32>
    %72 = tpu.matmul %71, %58, %cst_17 {dimension_numbers = #tpu.dot_dimension_numbers<[2], [1], [1], [2], [0, 0, 0, 1, 1, 2], [0], [0]>} : vector<2x8x8xbf16>, vector<2x8x8xbf16>, vector<2x8x8xf32> -> vector<2x8x8xf32>
    "tpu.trace_stop"() : () -> ()
    %73 = vector.shape_cast %72 : vector<2x8x8xf32> to vector<16x8xf32>
    %74 = arith.truncf %73 : vector<16x8xf32> to vector<16x8xbf16>
    %75 = vector.extract_strided_slice %49 {offsets = [0, 0], sizes = [8, 32], strides = [1, 1]} : vector<32x32xbf16> to vector<8x32xbf16>
    %cst_18 = arith.constant dense<0.000000e+00> : vector<16x32xf32>
    %76 = tpu.matmul %74, %75, %cst_18 {dimension_numbers = #tpu.dot_dimension_numbers<[1], [0], [0], [1], [0, 0, 1, 1], [], []>} : vector<16x8xbf16>, vector<8x32xbf16>, vector<16x32xf32> -> vector<16x32xf32>
    %77 = vector.extract_strided_slice %37 {offsets = [0, 8], sizes = [16, 8], strides = [1, 1]} : vector<16x32xf32> to vector<16x8xf32>
    %78 = vector.shape_cast %77 : vector<16x8xf32> to vector<2x8x8xf32>
    %79 = arith.truncf %78 : vector<2x8x8xf32> to vector<2x8x8xbf16>
    %80 = vector.extract_strided_slice %38 {offsets = [0, 8], sizes = [16, 8], strides = [1, 1]} : vector<16x32xf32> to vector<16x8xf32>
    %81 = vector.shape_cast %80 : vector<16x8xf32> to vector<2x8x8xf32>
    %82 = arith.truncf %81 : vector<2x8x8xf32> to vector<2x8x8xbf16>
    %83 = vector.extract_strided_slice %39 {offsets = [0, 8], sizes = [16, 8], strides = [1, 1]} : vector<16x32xf32> to vector<16x8xf32>
    %84 = vector.shape_cast %83 : vector<16x8xf32> to vector<2x8x8xf32>
    %85 = arith.truncf %84 : vector<2x8x8xf32> to vector<2x8x8xbf16>
    "tpu.trace_start"() <{level = 10 : i32, message = "bqd,bkd->bqk"}> : () -> ()
    %cst_19 = arith.constant dense<0.000000e+00> : vector<2x8x8xf32>
    %86 = tpu.matmul %79, %82, %cst_19 {dimension_numbers = #tpu.dot_dimension_numbers<[2], [2], [1], [1], [0, 0, 0, 1, 1, 1], [0], [0]>} : vector<2x8x8xbf16>, vector<2x8x8xbf16>, vector<2x8x8xf32> -> vector<2x8x8xf32>
    "tpu.trace_stop"() : () -> ()
    %87 = arith.addf %86, %48 : vector<2x8x8xf32>
    %cst_20 = arith.constant dense<0xFF800000> : vector<2x8xf32>
    %88 = vector.multi_reduction <maximumf>, %87, %cst_20 [2] : vector<2x8x8xf32> to vector<2x8xf32>
    %89 = vector.shape_cast %88 : vector<2x8xf32> to vector<2x8x1xf32>
    %90 = vector.broadcast %89 : vector<2x8x1xf32> to vector<2x8x8xf32>
    %91 = arith.subf %87, %90 : vector<2x8x8xf32>
    %92 = math.exp %91 : vector<2x8x8xf32>
    %cst_21 = arith.constant dense<0.000000e+00> : vector<2x8xf32>
    %93 = vector.multi_reduction <add>, %92, %cst_21 [2] : vector<2x8x8xf32> to vector<2x8xf32>
    %94 = vector.shape_cast %93 : vector<2x8xf32> to vector<2x8x1xf32>
    %95 = tpu.reciprocal %94 {approx = true} : vector<2x8x1xf32> -> vector<2x8x1xf32>
    %96 = vector.broadcast %95 : vector<2x8x1xf32> to vector<2x8x8xf32>
    %97 = arith.mulf %92, %96 : vector<2x8x8xf32>
    %98 = arith.truncf %97 : vector<2x8x8xf32> to vector<2x8x8xbf16>
    "tpu.trace_start"() <{level = 10 : i32, message = "bqk,bkd->bqd"}> : () -> ()
    %cst_22 = arith.constant dense<0.000000e+00> : vector<2x8x8xf32>
    %99 = tpu.matmul %98, %85, %cst_22 {dimension_numbers = #tpu.dot_dimension_numbers<[2], [1], [1], [2], [0, 0, 0, 1, 1, 2], [0], [0]>} : vector<2x8x8xbf16>, vector<2x8x8xbf16>, vector<2x8x8xf32> -> vector<2x8x8xf32>
    "tpu.trace_stop"() : () -> ()
    %100 = vector.shape_cast %99 : vector<2x8x8xf32> to vector<16x8xf32>
    %101 = arith.truncf %100 : vector<16x8xf32> to vector<16x8xbf16>
    %102 = vector.extract_strided_slice %49 {offsets = [8, 0], sizes = [8, 32], strides = [1, 1]} : vector<32x32xbf16> to vector<8x32xbf16>
    %cst_23 = arith.constant dense<0.000000e+00> : vector<16x32xf32>
    %103 = tpu.matmul %101, %102, %cst_23 {dimension_numbers = #tpu.dot_dimension_numbers<[1], [0], [0], [1], [0, 0, 1, 1], [], []>} : vector<16x8xbf16>, vector<8x32xbf16>, vector<16x32xf32> -> vector<16x32xf32>
    %104 = arith.addf %76, %103 : vector<16x32xf32>
    %105 = vector.extract_strided_slice %37 {offsets = [0, 16], sizes = [16, 8], strides = [1, 1]} : vector<16x32xf32> to vector<16x8xf32>
    %106 = vector.shape_cast %105 : vector<16x8xf32> to vector<2x8x8xf32>
    %107 = arith.truncf %106 : vector<2x8x8xf32> to vector<2x8x8xbf16>
    %108 = vector.extract_strided_slice %38 {offsets = [0, 16], sizes = [16, 8], strides = [1, 1]} : vector<16x32xf32> to vector<16x8xf32>
    %109 = vector.shape_cast %108 : vector<16x8xf32> to vector<2x8x8xf32>
    %110 = arith.truncf %109 : vector<2x8x8xf32> to vector<2x8x8xbf16>
    %111 = vector.extract_strided_slice %39 {offsets = [0, 16], sizes = [16, 8], strides = [1, 1]} : vector<16x32xf32> to vector<16x8xf32>
    %112 = vector.shape_cast %111 : vector<16x8xf32> to vector<2x8x8xf32>
    %113 = arith.truncf %112 : vector<2x8x8xf32> to vector<2x8x8xbf16>
    "tpu.trace_start"() <{level = 10 : i32, message = "bqd,bkd->bqk"}> : () -> ()
    %cst_24 = arith.constant dense<0.000000e+00> : vector<2x8x8xf32>
    %114 = tpu.matmul %107, %110, %cst_24 {dimension_numbers = #tpu.dot_dimension_numbers<[2], [2], [1], [1], [0, 0, 0, 1, 1, 1], [0], [0]>} : vector<2x8x8xbf16>, vector<2x8x8xbf16>, vector<2x8x8xf32> -> vector<2x8x8xf32>
    "tpu.trace_stop"() : () -> ()
    %115 = arith.addf %114, %48 : vector<2x8x8xf32>
    %cst_25 = arith.constant dense<0xFF800000> : vector<2x8xf32>
    %116 = vector.multi_reduction <maximumf>, %115, %cst_25 [2] : vector<2x8x8xf32> to vector<2x8xf32>
    %117 = vector.shape_cast %116 : vector<2x8xf32> to vector<2x8x1xf32>
    %118 = vector.broadcast %117 : vector<2x8x1xf32> to vector<2x8x8xf32>
    %119 = arith.subf %115, %118 : vector<2x8x8xf32>
    %120 = math.exp %119 : vector<2x8x8xf32>
    %cst_26 = arith.constant dense<0.000000e+00> : vector<2x8xf32>
    %121 = vector.multi_reduction <add>, %120, %cst_26 [2] : vector<2x8x8xf32> to vector<2x8xf32>
    %122 = vector.shape_cast %121 : vector<2x8xf32> to vector<2x8x1xf32>
    %123 = tpu.reciprocal %122 {approx = true} : vector<2x8x1xf32> -> vector<2x8x1xf32>
    %124 = vector.broadcast %123 : vector<2x8x1xf32> to vector<2x8x8xf32>
    %125 = arith.mulf %120, %124 : vector<2x8x8xf32>
    %126 = arith.truncf %125 : vector<2x8x8xf32> to vector<2x8x8xbf16>
    "tpu.trace_start"() <{level = 10 : i32, message = "bqk,bkd->bqd"}> : () -> ()
    %cst_27 = arith.constant dense<0.000000e+00> : vector<2x8x8xf32>
    %127 = tpu.matmul %126, %113, %cst_27 {dimension_numbers = #tpu.dot_dimension_numbers<[2], [1], [1], [2], [0, 0, 0, 1, 1, 2], [0], [0]>} : vector<2x8x8xbf16>, vector<2x8x8xbf16>, vector<2x8x8xf32> -> vector<2x8x8xf32>
    "tpu.trace_stop"() : () -> ()
    %128 = vector.shape_cast %127 : vector<2x8x8xf32> to vector<16x8xf32>
    %129 = arith.truncf %128 : vector<16x8xf32> to vector<16x8xbf16>
    %130 = vector.extract_strided_slice %49 {offsets = [16, 0], sizes = [8, 32], strides = [1, 1]} : vector<32x32xbf16> to vector<8x32xbf16>
    %cst_28 = arith.constant dense<0.000000e+00> : vector<16x32xf32>
    %131 = tpu.matmul %129, %130, %cst_28 {dimension_numbers = #tpu.dot_dimension_numbers<[1], [0], [0], [1], [0, 0, 1, 1], [], []>} : vector<16x8xbf16>, vector<8x32xbf16>, vector<16x32xf32> -> vector<16x32xf32>
    %132 = arith.addf %104, %131 : vector<16x32xf32>
    %133 = vector.extract_strided_slice %37 {offsets = [0, 24], sizes = [16, 8], strides = [1, 1]} : vector<16x32xf32> to vector<16x8xf32>
    %134 = vector.shape_cast %133 : vector<16x8xf32> to vector<2x8x8xf32>
    %135 = arith.truncf %134 : vector<2x8x8xf32> to vector<2x8x8xbf16>
    %136 = vector.extract_strided_slice %38 {offsets = [0, 24], sizes = [16, 8], strides = [1, 1]} : vector<16x32xf32> to vector<16x8xf32>
    %137 = vector.shape_cast %136 : vector<16x8xf32> to vector<2x8x8xf32>
    %138 = arith.truncf %137 : vector<2x8x8xf32> to vector<2x8x8xbf16>
    %139 = vector.extract_strided_slice %39 {offsets = [0, 24], sizes = [16, 8], strides = [1, 1]} : vector<16x32xf32> to vector<16x8xf32>
    %140 = vector.shape_cast %139 : vector<16x8xf32> to vector<2x8x8xf32>
    %141 = arith.truncf %140 : vector<2x8x8xf32> to vector<2x8x8xbf16>
    "tpu.trace_start"() <{level = 10 : i32, message = "bqd,bkd->bqk"}> : () -> ()
    %cst_29 = arith.constant dense<0.000000e+00> : vector<2x8x8xf32>
    %142 = tpu.matmul %135, %138, %cst_29 {dimension_numbers = #tpu.dot_dimension_numbers<[2], [2], [1], [1], [0, 0, 0, 1, 1, 1], [0], [0]>} : vector<2x8x8xbf16>, vector<2x8x8xbf16>, vector<2x8x8xf32> -> vector<2x8x8xf32>
    "tpu.trace_stop"() : () -> ()
    %143 = arith.addf %142, %48 : vector<2x8x8xf32>
    %cst_30 = arith.constant dense<0xFF800000> : vector<2x8xf32>
    %144 = vector.multi_reduction <maximumf>, %143, %cst_30 [2] : vector<2x8x8xf32> to vector<2x8xf32>
    %145 = vector.shape_cast %144 : vector<2x8xf32> to vector<2x8x1xf32>
    %146 = vector.broadcast %145 : vector<2x8x1xf32> to vector<2x8x8xf32>
    %147 = arith.subf %143, %146 : vector<2x8x8xf32>
    %148 = math.exp %147 : vector<2x8x8xf32>
    %cst_31 = arith.constant dense<0.000000e+00> : vector<2x8xf32>
    %149 = vector.multi_reduction <add>, %148, %cst_31 [2] : vector<2x8x8xf32> to vector<2x8xf32>
    %150 = vector.shape_cast %149 : vector<2x8xf32> to vector<2x8x1xf32>
    %151 = tpu.reciprocal %150 {approx = true} : vector<2x8x1xf32> -> vector<2x8x1xf32>
    %152 = vector.broadcast %151 : vector<2x8x1xf32> to vector<2x8x8xf32>
    %153 = arith.mulf %148, %152 : vector<2x8x8xf32>
    %154 = arith.truncf %153 : vector<2x8x8xf32> to vector<2x8x8xbf16>
    "tpu.trace_start"() <{level = 10 : i32, message = "bqk,bkd->bqd"}> : () -> ()
    %cst_32 = arith.constant dense<0.000000e+00> : vector<2x8x8xf32>
    %155 = tpu.matmul %154, %141, %cst_32 {dimension_numbers = #tpu.dot_dimension_numbers<[2], [1], [1], [2], [0, 0, 0, 1, 1, 2], [0], [0]>} : vector<2x8x8xbf16>, vector<2x8x8xbf16>, vector<2x8x8xf32> -> vector<2x8x8xf32>
    "tpu.trace_stop"() : () -> ()
    %156 = vector.shape_cast %155 : vector<2x8x8xf32> to vector<16x8xf32>
    %157 = arith.truncf %156 : vector<16x8xf32> to vector<16x8xbf16>
    %158 = vector.extract_strided_slice %49 {offsets = [24, 0], sizes = [8, 32], strides = [1, 1]} : vector<32x32xbf16> to vector<8x32xbf16>
    %cst_33 = arith.constant dense<0.000000e+00> : vector<16x32xf32>
    %159 = tpu.matmul %157, %158, %cst_33 {dimension_numbers = #tpu.dot_dimension_numbers<[1], [0], [0], [1], [0, 0, 1, 1], [], []>} : vector<16x8xbf16>, vector<8x32xbf16>, vector<16x32xf32> -> vector<16x32xf32>
    %160 = arith.addf %132, %159 : vector<16x32xf32>
    %161 = vector.broadcast %6 : vector<1x32xf32> to vector<16x32xf32>
    %162 = arith.addf %160, %161 : vector<16x32xf32>
    %163 = arith.addf %0, %162 : vector<16x32xf32>
    %cst_34 = arith.constant dense<0.000000e+00> : vector<16xf32>
    %164 = vector.multi_reduction <add>, %163, %cst_34 [1] : vector<16x32xf32> to vector<16xf32>
    %165 = vector.shape_cast %164 : vector<16xf32> to vector<16x1xf32>
    %cst_35 = arith.constant 3.200000e+01 : f32
    %166 = vector.broadcast %cst_35 : f32 to vector<16x1xf32>
    %167 = arith.divf %165, %166 : vector<16x1xf32>
    %168 = vector.broadcast %167 : vector<16x1xf32> to vector<16x32xf32>
    %169 = arith.subf %163, %168 : vector<16x32xf32>
    %170 = arith.mulf %169, %169 : vector<16x32xf32>
    %cst_36 = arith.constant dense<0.000000e+00> : vector<16xf32>
    %171 = vector.multi_reduction <add>, %170, %cst_36 [1] : vector<16x32xf32> to vector<16xf32>
    %172 = vector.shape_cast %171 : vector<16xf32> to vector<16x1xf32>
    %cst_37 = arith.constant 3.200000e+01 : f32
    %173 = vector.broadcast %cst_37 : f32 to vector<16x1xf32>
    %174 = arith.divf %172, %173 : vector<16x1xf32>
    %175 = vector.broadcast %167 : vector<16x1xf32> to vector<16x32xf32>
    %176 = arith.subf %163, %175 : vector<16x32xf32>
    %cst_38 = arith.constant 9.99999974E-6 : f32
    %177 = vector.broadcast %cst_38 : f32 to vector<16x1xf32>
    %178 = arith.addf %174, %177 : vector<16x1xf32>
    %179 = math.rsqrt %178 : vector<16x1xf32>
    %180 = vector.broadcast %179 : vector<16x1xf32> to vector<16x32xf32>
    %181 = arith.mulf %176, %180 : vector<16x32xf32>
    %182 = vector.broadcast %4 : vector<1x32xf32> to vector<16x32xf32>
    %183 = arith.mulf %181, %182 : vector<16x32xf32>
    %184 = vector.broadcast %5 : vector<1x32xf32> to vector<16x32xf32>
    %185 = arith.addf %183, %184 : vector<16x32xf32>
    %186 = arith.truncf %185 : vector<16x32xf32> to vector<16x32xbf16>
    %c0_39 = arith.constant 0 : index
    %c0_40 = arith.constant 0 : index
    %187 = vector.load %arg5[%c0_39, %c0_40] : memref<32x128xbf16, #tpu.memory_space<vmem>>, vector<32x128xbf16>
    %cst_41 = arith.constant dense<0.000000e+00> : vector<16x128xf32>
    %188 = tpu.matmul %186, %187, %cst_41 {dimension_numbers = #tpu.dot_dimension_numbers<[1], [0], [0], [1], [0, 0, 1, 1], [], []>} : vector<16x32xbf16>, vector<32x128xbf16>, vector<16x128xf32> -> vector<16x128xf32>
    %189 = vector.broadcast %8 : vector<1x128xf32> to vector<16x128xf32>
    %190 = arith.addf %188, %189 : vector<16x128xf32>
    %cst_42 = arith.constant 5.000000e-01 : f32
    %191 = vector.broadcast %cst_42 : f32 to vector<16x128xf32>
    %192 = arith.mulf %191, %190 : vector<16x128xf32>
    %cst_43 = arith.constant 4.471500e-02 : f32
    %193 = vector.broadcast %cst_43 : f32 to vector<16x128xf32>
    %194 = arith.mulf %193, %190 : vector<16x128xf32>
    %195 = arith.mulf %194, %190 : vector<16x128xf32>
    %196 = arith.mulf %195, %190 : vector<16x128xf32>
    %197 = arith.addf %190, %196 : vector<16x128xf32>
    %cst_44 = arith.constant 0.797884583 : f32
    %198 = vector.broadcast %cst_44 : f32 to vector<16x128xf32>
    %199 = arith.mulf %198, %197 : vector<16x128xf32>
    %200 = math.tanh %199 : vector<16x128xf32>
    %cst_45 = arith.constant 1.000000e+00 : f32
    %201 = vector.broadcast %cst_45 : f32 to vector<16x128xf32>
    %202 = arith.addf %201, %200 : vector<16x128xf32>
    %203 = arith.mulf %192, %202 : vector<16x128xf32>
    %204 = arith.truncf %203 : vector<16x128xf32> to vector<16x128xbf16>
    %c0_46 = arith.constant 0 : index
    %c0_47 = arith.constant 0 : index
    %205 = vector.load %arg6[%c0_46, %c0_47] : memref<128x32xbf16, #tpu.memory_space<vmem>>, vector<128x32xbf16>
    %cst_48 = arith.constant dense<0.000000e+00> : vector<16x32xf32>
    %206 = tpu.matmul %204, %205, %cst_48 {dimension_numbers = #tpu.dot_dimension_numbers<[1], [0], [0], [1], [0, 0, 1, 1], [], []>} : vector<16x128xbf16>, vector<128x32xbf16>, vector<16x32xf32> -> vector<16x32xf32>
    %207 = vector.broadcast %7 : vector<1x32xf32> to vector<16x32xf32>
    %208 = arith.addf %206, %207 : vector<16x32xf32>
    %209 = arith.addf %163, %208 : vector<16x32xf32>
    %cst_49 = arith.constant 0.000000e+00 : f32
    %210 = vector.broadcast %cst_49 : f32 to vector<16x32xf32>
    %211 = tpu.concatenate %209, %38, %39, %210 in 1 : vector<16x32xf32>, vector<16x32xf32>, vector<16x32xf32>, vector<16x32xf32> -> vector<16x128xf32>
    %c0_50 = arith.constant 0 : index
    %c0_51 = arith.constant 0 : index
    %212 = vector.load %arg7[%c0_50, %c0_51] : memref<16x128xf32, #tpu.memory_space<vmem>>, vector<16x128xf32>
    tpu.vector_store %arg7[%c0_50, %c0_51], %211 {strides = array<i32>} : memref<16x128xf32, #tpu.memory_space<vmem>>, vector<16x128xf32>,
    return
  }
  func.func @transform_0(%arg0: i32) -> (i32, i32) {
    %c0_i32 = arith.constant 0 : i32
    %c0_i32_0 = arith.constant 0 : i32
    %c0_i32_1 = arith.constant 0 : i32
    return %c0_i32, %c0_i32_0 : i32, i32
  }
  func.func @transform_1(%arg0: i32) -> (i32, i32) {
    %c0_i32 = arith.constant 0 : i32
    %c0_i32_0 = arith.constant 0 : i32
    %c0_i32_1 = arith.constant 0 : i32
    return %c0_i32, %c0_i32_0 : i32, i32
  }
  func.func @transform_2(%arg0: i32) -> (i32, i32) {
    %c0_i32 = arith.constant 0 : i32
    %c0_i32_0 = arith.constant 0 : i32
    %c0_i32_1 = arith.constant 0 : i32
    return %c0_i32, %c0_i32_0 : i32, i32
  }
  func.func @transform_3(%arg0: i32) -> (i32, i32) {
    %c0_i32 = arith.constant 0 : i32
    %c0_i32_0 = arith.constant 0 : i32
    %c0_i32_1 = arith.constant 0 : i32
    return %c0_i32, %c0_i32_0 : i32, i32
  }
  func.func @transform_4(%arg0: i32) -> (i32, i32) {
    %c0_i32 = arith.constant 0 : i32
    %c0_i32_0 = arith.constant 0 : i32
    %c0_i32_1 = arith.constant 0 : i32
    return %c0_i32, %c0_i32_0 : i32, i32
  }
  func.func @transform_5(%arg0: i32) -> (i32, i32) {
    %c0_i32 = arith.constant 0 : i32
    %c0_i32_0 = arith.constant 0 : i32
    %c0_i32_1 = arith.constant 0 : i32
    return %c0_i32, %c0_i32_0 : i32, i32
  }
  func.func @transform_6(%arg0: i32) -> (i32, i32) {
    %c0_i32 = arith.constant 0 : i32
    %c0_i32_0 = arith.constant 0 : i32
    %c0_i32_1 = arith.constant 0 : i32
    return %c0_i32, %c0_i32_0 : i32, i32
  }
}

</mosaic_0001>

<llo_original>
// kernel: gpt2_block.1
$region0: #{gpt2_block.1}
  #allocation0 [shape = 'u32[]', space=smem, size = 0x4, offset = 0x4, fixed_abs, tag = 'smem constant byte address 0x4 - core index']
  #allocation1 [shape = 'u32[144,128]{1,0:T(1,128)}', space=vmem, size = 0x12000, scoped, tag = 'internal scratch']
  %s0 = inlined_call_operand.vmem [shape: f32[16,32], index: 0, kind: input, shape index: {}]
  %s1 = inlined_call_operand.vmem [shape: f32[8,128], index: 1, kind: input, shape index: {}]
  %s2 = inlined_call_operand.vmem [shape: bf16[32,96], index: 2, kind: input, shape index: {}]
  %s3 = inlined_call_operand.vmem [shape: bf16[32,32], index: 3, kind: input, shape index: {}]
  %s4 = inlined_call_operand.vmem [shape: bf16[32,128], index: 4, kind: input, shape index: {}]
  %s5 = inlined_call_operand.vmem [shape: bf16[128,32], index: 5, kind: input, shape index: {}]
  %s6 = inlined_call_operand.vmem [shape: f32[16,128], index: 6, kind: output, shape index: {}]
  %s7 = sld [smem:[#allocation0]]
  $region34: #{gpt2_block.1} parent=0
    _
  %s9 = ssub.s32 1, %s7
  %s10 = scalar_select 0, %s9, %s7
  // Predicated region
  $region2: #{gpt2_block.1} parent=0 // pred_check
    _
  $region3: #{gpt2_block.1} parent=0 // pred_check_branch
    %12 = sbr.rel (0) target = $region5
  $region4: #{gpt2_block.1} parent=0 // pred_region
    _
  $region5: #{gpt2_block.1} parent=0 // pred_fallthru
    _
  // Predicated region
  $region6: #{gpt2_block.1} parent=0 // pred_check
    _
  $region7: #{gpt2_block.1} parent=0 // pred_check_branch
    %14 = sbr.rel (0) target = $region9
  $region8: #{gpt2_block.1} parent=0 // pred_region
    _
  $region9: #{gpt2_block.1} parent=0 // pred_fallthru
    _
  // Predicated region
  $region10: #{gpt2_block.1} parent=0 // pred_check
    _
  $region11: #{gpt2_block.1} parent=0 // pred_check_branch
    %16 = sbr.rel (0) target = $region13
  $region12: #{gpt2_block.1} parent=0 // pred_region
    _
  $region13: #{gpt2_block.1} parent=0 // pred_fallthru
    _
  // Predicated region
  $region14: #{gpt2_block.1} parent=0 // pred_check
    _
  $region15: #{gpt2_block.1} parent=0 // pred_check_branch
    %18 = sbr.rel (0) target = $region17
  $region16: #{gpt2_block.1} parent=0 // pred_region
    _
  $region17: #{gpt2_block.1} parent=0 // pred_fallthru
    _
  // Predicated region
  $region18: #{gpt2_block.1} parent=0 // pred_check
    _
  $region19: #{gpt2_block.1} parent=0 // pred_check_branch
    %20 = sbr.rel (0) target = $region21
  $region20: #{gpt2_block.1} parent=0 // pred_region
    _
  $region21: #{gpt2_block.1} parent=0 // pred_fallthru
    _
  // Predicated region
  $region22: #{gpt2_block.1} parent=0 // pred_check
    _
  $region23: #{gpt2_block.1} parent=0 // pred_check_branch
    %22 = sbr.rel (0) target = $region25
  $region24: #{gpt2_block.1} parent=0 // pred_region
    _
  $region25: #{gpt2_block.1} parent=0 // pred_fallthru
    _
  %v24 = vld [vmem:[%s0] sm:$0xff]
  %v25 = vld [vmem:[%s0 + $0x8] sm:$0xff]
  %v26 = vld [vmem:[%s1] sm:$0xff]
  %vm27 = vcmask 261120
  %v28 = vsel %vm27, %v24, 0.0
  %29 = vadd.xlane.f32.xlu0 %v28
  %v30 = vpop.xlane.xlu0 %29
  %v31 = vsel %vm27, %v25, 0.0
  %32 = vadd.xlane.f32.xlu0 %v31
  %v33 = vpop.xlane.xlu0 %32
  %v34 = vrcp.pop 32.0
  %v35 = vmul.f32 %v30, %v34
  %v36 = vmul.f32 %v33, %v34
  %v37 = vsub.f32 %v24, %v35
  %v38 = vsub.f32 %v25, %v36
  %v39 = vmul.f32 %v37, %v37
  %v40 = vmul.f32 %v38, %v38
  %v41 = vsel %vm27, %v39, 0.0
  %42 = vadd.xlane.f32.xlu0 %v41
  %v43 = vpop.xlane.xlu0 %42
  %v44 = vsel %vm27, %v40, 0.0
  %45 = vadd.xlane.f32.xlu0 %v44
  %v46 = vpop.xlane.xlu0 %45
  %v47 = vmul.f32 %v43, %v34
  %v48 = vmul.f32 %v46, %v34
  %v49 = vadd.f32 %v47, 1e-05
  %v50 = vadd.f32 %v48, 1e-05
  %v51 = vrsqrt.pop %v49
  %v52 = vrsqrt.pop %v50
  %v53 = vmul.f32 %v37, %v51
  %v54 = vmul.f32 %v38, %v52
  %v55 = vlaneseq
  %v56 = vshrl.u32 %v55, 7
  %v57 = vsub.s32 0, %v56
  %v58 = vrot.slane %v26, %v57
  %v59 = vmul.f32 %v53, %v58
  %v60 = vmul.f32 %v54, %v58
  %v61 = vlaneseq
  %v62 = vshrl.u32 %v61, 7
  %v63 = vsub.s32 1, %v62
  %v64 = vrot.slane %v26, %v63
  %v65 = vadd.f32 %v59, %v64
  %v66 = vadd.f32 %v60, %v64
  %v67 = vpack.c.bf16 %v66, %v65
  %v68 = vld [vmem:[%s2] sm:$0xf]
  %v69 = vld [vmem:[%s2 + $0x4] sm:$0xf]
  %v70 = vld [vmem:[%s2 + $0x8] sm:$0xf]
  %v71 = vld [vmem:[%s2 + $0xc] sm:$0xf]
  %v72 = vlaneseq
  %v73 = vshrl.u32 %v72, 7
  %v74 = vsub.s32 7, %v73
  %v75 = vrot.slane %v26, %v74
  %v80 = vunpack.c.l.b16 %v68
  %v81 = vunpack.c.l.b16 %v69
  %v82 = vunpack.c.l.b16 %v70
  %v83 = vunpack.c.l.b16 %v71
  %v84 = vpack.c.b16 %v81, %v80
  %v85 = vpack.c.b16 %v83, %v82
  %v89 = vsel %vm27, %v67, 0
  %91 = vmatprep.subr.bf16.mxu0 0
  %92 = vmatpush1.bf16.msra.mxu0 %v84
  %93 = vmatprep.subr.bf16.mxu0 0
  %94 = vmatpush1.bf16.msra.mxu0 %v85
  %95 = vmatprep.subr.bf16.mxu0 0
  %96 = vmatpush1.bf16.msra.mxu0 0
  %97 = vmatprep.subr.bf16.mxu0 0
  %98 = vmatpush1.bf16.msra.mxu0 0
  %99 = vmatprep.subr.bf16.mxu0 0
  %100 = vmatpush1.bf16.msra.mxu0 0
  %101 = vmatprep.subr.bf16.mxu0 0
  %102 = vmatpush1.bf16.msra.mxu0 0
  %103 = vmatprep.subr.bf16.mxu0 0
  %104 = vmatpush1.bf16.msra.mxu0 0
  %105 = vmatprep.subr.bf16.mxu0 0
  %106 = vmatpush1.bf16.msra.mxu0 0
  %107 = vmatprep.subr.bf16.mxu0 0
  %108 = vmatpush1.bf16.msra.mxu0 0
  %109 = vmatprep.subr.bf16.mxu0 0
  %110 = vmatpush1.bf16.msra.mxu0 0
  %111 = vmatprep.subr.bf16.mxu0 0
  %112 = vmatpush1.bf16.msra.mxu0 0
  %113 = vmatprep.subr.bf16.mxu0 0
  %114 = vmatpush1.bf16.msra.mxu0 0
  %115 = vmatprep.subr.bf16.mxu0 0
  %116 = vmatpush1.bf16.msra.mxu0 0
  %117 = vmatprep.subr.bf16.mxu0 0
  %118 = vmatpush1.bf16.msra.mxu0 0
  %119 = vmatprep.subr.bf16.mxu0 0
  %120 = vmatpush1.bf16.msra.mxu0 0
  %121 = vmatprep.subr.bf16.mxu0 0
  %122 = vmatpush1.bf16.msra.mxu0 0
  %123 = vmatprep.mubr.bf16.mxu0 0
  %124 = vmatmul.mubr.bf16.gmra.mrb[0].mxu0 %v89
  %v125 = vpop.f32.mrb[0].mxu0
  %v126 = vadd.f32 %v75, %v125
  %v127 = vpop.f32.mrb[0].mxu0
  %v128 = vpop.f32.mrb[0].mxu0
  %v129 = vadd.f32 %v75, %v128
  %v130 = vpop.f32.mrb[0].mxu0
  %131 = vdwg.mxu0
  %v132 = vlaneseq
  %v133 = vshrl.u32 %v132, 7
  %v134 = vlaneseq
  %v135 = vand.u32 %v134, 127
  %vm136 = vcmp.ge.s32.totalorder %v133, %v135
  %v137 = vsel %vm136, 0.0, -1e+18
  %v138 = vld [vmem:[%s3] sm:$0xf]
  %v139 = vld [vmem:[%s3 + $0x4] sm:$0xf]
  %v140 = vld [vmem:[%s3 + $0x8] sm:$0xf]
  %v141 = vld [vmem:[%s3 + $0xc] sm:$0xf]
  %v142 = vpack.c.bf16 %v126, %v126
  %v143 = vpack.c.bf16 %v129, %v129
  %145 = vrot.lane.b32.xlu0 %v142, 96
  %v146 = vpop.permute.xlu0 %145
  %vm147 = vcmask 64512
  %v149 = vsel %vm147, %v142, 0
  %v152 = vsel %vm147, %v146, 0
  %154 = vmatprep.subr.bf16.mxu0 0
  %155 = vmatpush1.bf16.xpose.msra.mxu0 %v152
  %156 = vmatprep.subr.bf16.mxu0 0
  %157 = vmatpush1.bf16.xpose.msra.mxu0 0
  %158 = vmatprep.subr.bf16.mxu0 0
  %159 = vmatpush1.bf16.xpose.msra.mxu0 0
  %160 = vmatprep.subr.bf16.mxu0 0
  %161 = vmatpush1.bf16.xpose.msra.mxu0 0
  %162 = vmatprep.subr.bf16.mxu0 0
  %163 = vmatpush1.bf16.xpose.msra.mxu0 0
  %164 = vmatprep.subr.bf16.mxu0 0
  %165 = vmatpush1.bf16.xpose.msra.mxu0 0
  %166 = vmatprep.subr.bf16.mxu0 0
  %167 = vmatpush1.bf16.xpose.msra.mxu0 0
  %168 = vmatprep.subr.bf16.mxu0 0
  %169 = vmatpush1.bf16.xpose.msra.mxu0 0
  %170 = vmatprep.subr.bf16.mxu0 0
  %171 = vmatpush1.bf16.xpose.msra.mxu0 0
  %172 = vmatprep.subr.bf16.mxu0 0
  %173 = vmatpush1.bf16.xpose.msra.mxu0 0
  %174 = vmatprep.subr.bf16.mxu0 0
  %175 = vmatpush1.bf16.xpose.msra.mxu0 0
  %176 = vmatprep.subr.bf16.mxu0 0
  %177 = vmatpush1.bf16.xpose.msra.mxu0 0
  %178 = vmatprep.subr.bf16.mxu0 0
  %179 = vmatpush1.bf16.xpose.msra.mxu0 0
  %180 = vmatprep.subr.bf16.mxu0 0
  %181 = vmatpush1.bf16.xpose.msra.mxu0 0
  %182 = vmatprep.subr.bf16.mxu0 0
  %183 = vmatpush1.bf16.xpose.msra.mxu0 0
  %184 = vmatprep.subr.bf16.mxu0 0
  %185 = vmatpush1.bf16.xpose.msra.mxu0 0
  %186 = vmatprep.mubr.bf16.mxu0 0
  %187 = vmatmul.mubr.bf16.gmra.mrb[0].mxu0 %v149
  %v188 = vpop.f32.mrb[0].mxu0
  %v189 = vadd.f32 %v137, %v188
  %v190 = vpop.f32.mrb[0].mxu0
  %v191 = vpop.f32.mrb[0].mxu0
  %v192 = vpop.f32.mrb[0].mxu0
  %193 = vdwg.mxu0
  %195 = vrot.lane.b32.xlu0 %v143, 96
  %v196 = vpop.permute.xlu0 %195
  %v198 = vsel %vm147, %v143, 0
  %v201 = vsel %vm147, %v196, 0
  %203 = vmatprep.subr.bf16.mxu0 0
  %204 = vmatpush1.bf16.xpose.msra.mxu0 %v201
  %205 = vmatprep.subr.bf16.mxu0 0
  %206 = vmatpush1.bf16.xpose.msra.mxu0 0
  %207 = vmatprep.subr.bf16.mxu0 0
  %208 = vmatpush1.bf16.xpose.msra.mxu0 0
  %209 = vmatprep.subr.bf16.mxu0 0
  %210 = vmatpush1.bf16.xpose.msra.mxu0 0
  %211 = vmatprep.subr.bf16.mxu0 0
  %212 = vmatpush1.bf16.xpose.msra.mxu0 0
  %213 = vmatprep.subr.bf16.mxu0 0
  %214 = vmatpush1.bf16.xpose.msra.mxu0 0
  %215 = vmatprep.subr.bf16.mxu0 0
  %216 = vmatpush1.bf16.xpose.msra.mxu0 0
  %217 = vmatprep.subr.bf16.mxu0 0
  %218 = vmatpush1.bf16.xpose.msra.mxu0 0
  %219 = vmatprep.subr.bf16.mxu0 0
  %220 = vmatpush1.bf16.xpose.msra.mxu0 0
  %221 = vmatprep.subr.bf16.mxu0 0
  %222 = vmatpush1.bf16.xpose.msra.mxu0 0
  %223 = vmatprep.subr.bf16.mxu0 0
  %224 = vmatpush1.bf16.xpose.msra.mxu0 0
  %225 = vmatprep.subr.bf16.mxu0 0
  %226 = vmatpush1.bf16.xpose.msra.mxu0 0
  %227 = vmatprep.subr.bf16.mxu0 0
  %228 = vmatpush1.bf16.xpose.msra.mxu0 0
  %229 = vmatprep.subr.bf16.mxu0 0
  %230 = vmatpush1.bf16.xpose.msra.mxu0 0
  %231 = vmatprep.subr.bf16.mxu0 0
  %232 = vmatpush1.bf16.xpose.msra.mxu0 0
  %233 = vmatprep.subr.bf16.mxu0 0
  %234 = vmatpush1.bf16.xpose.msra.mxu0 0
  %235 = vmatprep.mubr.bf16.mxu0 0
  %236 = vmatmul.mubr.bf16.gmra.mrb[0].mxu0 %v198
  %v237 = vpop.f32.mrb[0].mxu0
  %v238 = vadd.f32 %v137, %v237
  %v239 = vpop.f32.mrb[0].mxu0
  %v240 = vpop.f32.mrb[0].mxu0
  %v241 = vpop.f32.mrb[0].mxu0
  %242 = vdwg.mxu0
  %v243 = vsel %vm147, %v189, -inf
  %244 = vmax.xlane.f32.xlu0 %v243
  %v245 = vpop.xlane.xlu0 %244
  %v246 = vsel %vm147, %v238, -inf
  %247 = vmax.xlane.f32.xlu0 %v246
  %v248 = vpop.xlane.xlu0 %247
  %v249 = vsub.f32 %v189, %v245
  %v250 = vsub.f32 %v238, %v248
  %v251 = vmul.f32 %v249, 1.442695
  %v252 = vpow.pop %v251
  %v253 = vmul.f32 %v250, 1.442695
  %v254 = vpow.pop %v253
  %v255 = vsel %vm147, %v252, 0.0
  %256 = vadd.xlane.f32.xlu0 %v255
  %v257 = vpop.xlane.xlu0 %256
  %v258 = vsel %vm147, %v254, 0.0
  %259 = vadd.xlane.f32.xlu0 %v258
  %v260 = vpop.xlane.xlu0 %259
  %v261 = vrcp.pop %v257
  %v262 = vrcp.pop %v260
  %v263 = vmul.f32 %v252, %v261
  %v264 = vmul.f32 %v254, %v262
  %v265 = vpack.c.bf16 %v263, %v263
  %v266 = vpack.c.bf16 %v264, %v264
  %267 = vrot.lane.b32.xlu0 %v142, 64
  %v268 = vpop.permute.xlu0 %267
  %v270 = vsel %vm147, %v265, 0
  %vm272 = vcmask 1043456
  %v274 = vsel %vm272, %v268, 0
  %276 = vmatprep.subr.bf16.mxu0 0
  %277 = vmatpush1.bf16.msra.mxu0 %v274
  %278 = vmatprep.subr.bf16.mxu0 0
  %279 = vmatpush1.bf16.msra.mxu0 0
  %280 = vmatprep.subr.bf16.mxu0 0
  %281 = vmatpush1.bf16.msra.mxu0 0
  %282 = vmatprep.subr.bf16.mxu0 0
  %283 = vmatpush1.bf16.msra.mxu0 0
  %284 = vmatprep.subr.bf16.mxu0 0
  %285 = vmatpush1.bf16.msra.mxu0 0
  %286 = vmatprep.subr.bf16.mxu0 0
  %287 = vmatpush1.bf16.msra.mxu0 0
  %288 = vmatprep.subr.bf16.mxu0 0
  %289 = vmatpush1.bf16.msra.mxu0 0
  %290 = vmatprep.subr.bf16.mxu0 0
  %291 = vmatpush1.bf16.msra.mxu0 0
  %292 = vmatprep.subr.bf16.mxu0 0
  %293 = vmatpush1.bf16.msra.mxu0 0
  %294 = vmatprep.subr.bf16.mxu0 0
  %295 = vmatpush1.bf16.msra.mxu0 0
  %296 = vmatprep.subr.bf16.mxu0 0
  %297 = vmatpush1.bf16.msra.mxu0 0
  %298 = vmatprep.subr.bf16.mxu0 0
  %299 = vmatpush1.bf16.msra.mxu0 0
  %300 = vmatprep.subr.bf16.mxu0 0
  %301 = vmatpush1.bf16.msra.mxu0 0
  %302 = vmatprep.subr.bf16.mxu0 0
  %303 = vmatpush1.bf16.msra.mxu0 0
  %304 = vmatprep.subr.bf16.mxu0 0
  %305 = vmatpush1.bf16.msra.mxu0 0
  %306 = vmatprep.subr.bf16.mxu0 0
  %307 = vmatpush1.bf16.msra.mxu0 0
  %308 = vmatprep.mubr.bf16.mxu0 0
  %309 = vmatmul.mubr.bf16.gmra.mrb[0].mxu0 %v270
  %v310 = vpop.f32.mrb[0].mxu0
  %v311 = vadd.f32 0.0, %v310
  %v312 = vpop.f32.mrb[0].mxu0
  %v313 = vpop.f32.mrb[0].mxu0
  %v314 = vpop.f32.mrb[0].mxu0
  %315 = vdwg.mxu0
  %316 = vrot.lane.b32.xlu0 %v143, 64
  %v317 = vpop.permute.xlu0 %316
  %v319 = vsel %vm147, %v266, 0
  %v322 = vsel %vm272, %v317, 0
  %324 = vmatprep.subr.bf16.mxu0 0
  %325 = vmatpush1.bf16.msra.mxu0 %v322
  %326 = vmatprep.subr.bf16.mxu0 0
  %327 = vmatpush1.bf16.msra.mxu0 0
  %328 = vmatprep.subr.bf16.mxu0 0
  %329 = vmatpush1.bf16.msra.mxu0 0
  %330 = vmatprep.subr.bf16.mxu0 0
  %331 = vmatpush1.bf16.msra.mxu0 0
  %332 = vmatprep.subr.bf16.mxu0 0
  %333 = vmatpush1.bf16.msra.mxu0 0
  %334 = vmatprep.subr.bf16.mxu0 0
  %335 = vmatpush1.bf16.msra.mxu0 0
  %336 = vmatprep.subr.bf16.mxu0 0
  %337 = vmatpush1.bf16.msra.mxu0 0
  %338 = vmatprep.subr.bf16.mxu0 0
  %339 = vmatpush1.bf16.msra.mxu0 0
  %340 = vmatprep.subr.bf16.mxu0 0
  %341 = vmatpush1.bf16.msra.mxu0 0
  %342 = vmatprep.subr.bf16.mxu0 0
  %343 = vmatpush1.bf16.msra.mxu0 0
  %344 = vmatprep.subr.bf16.mxu0 0
  %345 = vmatpush1.bf16.msra.mxu0 0
  %346 = vmatprep.subr.bf16.mxu0 0
  %347 = vmatpush1.bf16.msra.mxu0 0
  %348 = vmatprep.subr.bf16.mxu0 0
  %349 = vmatpush1.bf16.msra.mxu0 0
  %350 = vmatprep.subr.bf16.mxu0 0
  %351 = vmatpush1.bf16.msra.mxu0 0
  %352 = vmatprep.subr.bf16.mxu0 0
  %353 = vmatpush1.bf16.msra.mxu0 0
  %354 = vmatprep.subr.bf16.mxu0 0
  %355 = vmatpush1.bf16.msra.mxu0 0
  %356 = vmatprep.mubr.bf16.mxu0 0
  %357 = vmatmul.mubr.bf16.gmra.mrb[0].mxu0 %v319
  %v358 = vpop.f32.mrb[0].mxu0
  %v359 = vadd.f32 0.0, %v358
  %v360 = vpop.f32.mrb[0].mxu0
  %v361 = vpop.f32.mrb[0].mxu0
  %v362 = vpop.f32.mrb[0].mxu0
  %363 = vdwg.mxu0
  %v364 = vpack.c.bf16 %v359, %v311
  %365 = vrot.lane.b32.xlu0 %v142, 120
  %v366 = vpop.permute.xlu0 %365
  %367 = vrot.lane.b32.xlu0 %v142, 88
  %v368 = vpop.permute.xlu0 %367
  %v370 = vsel %vm147, %v366, 0
  %v373 = vsel %vm147, %v368, 0
  %375 = vmatprep.subr.bf16.mxu0 0
  %376 = vmatpush1.bf16.xpose.msra.mxu0 %v373
  %377 = vmatprep.subr.bf16.mxu0 0
  %378 = vmatpush1.bf16.xpose.msra.mxu0 0
  %379 = vmatprep.subr.bf16.mxu0 0
  %380 = vmatpush1.bf16.xpose.msra.mxu0 0
  %381 = vmatprep.subr.bf16.mxu0 0
  %382 = vmatpush1.bf16.xpose.msra.mxu0 0
  %383 = vmatprep.subr.bf16.mxu0 0
  %384 = vmatpush1.bf16.xpose.msra.mxu0 0
  %385 = vmatprep.subr.bf16.mxu0 0
  %386 = vmatpush1.bf16.xpose.msra.mxu0 0
  %387 = vmatprep.subr.bf16.mxu0 0
  %388 = vmatpush1.bf16.xpose.msra.mxu0 0
  %389 = vmatprep.subr.bf16.mxu0 0
  %390 = vmatpush1.bf16.xpose.msra.mxu0 0
  %391 = vmatprep.subr.bf16.mxu0 0
  %392 = vmatpush1.bf16.xpose.msra.mxu0 0
  %393 = vmatprep.subr.bf16.mxu0 0
  %394 = vmatpush1.bf16.xpose.msra.mxu0 0
  %395 = vmatprep.subr.bf16.mxu0 0
  %396 = vmatpush1.bf16.xpose.msra.mxu0 0
  %397 = vmatprep.subr.bf16.mxu0 0
  %398 = vmatpush1.bf16.xpose.msra.mxu0 0
  %399 = vmatprep.subr.bf16.mxu0 0
  %400 = vmatpush1.bf16.xpose.msra.mxu0 0
  %401 = vmatprep.subr.bf16.mxu0 0
  %402 = vmatpush1.bf16.xpose.msra.mxu0 0
  %403 = vmatprep.subr.bf16.mxu0 0
  %404 = vmatpush1.bf16.xpose.msra.mxu0 0
  %405 = vmatprep.subr.bf16.mxu0 0
  %406 = vmatpush1.bf16.xpose.msra.mxu0 0
  %407 = vmatprep.mubr.bf16.mxu0 0
  %408 = vmatmul.mubr.bf16.gmra.mrb[0].mxu0 %v370
  %v409 = vpop.f32.mrb[0].mxu0
  %v410 = vadd.f32 %v137, %v409
  %v411 = vpop.f32.mrb[0].mxu0
  %v412 = vpop.f32.mrb[0].mxu0
  %v413 = vpop.f32.mrb[0].mxu0
  %414 = vdwg.mxu0
  %415 = vrot.lane.b32.xlu0 %v143, 120
  %v416 = vpop.permute.xlu0 %415
  %417 = vrot.lane.b32.xlu0 %v143, 88
  %v418 = vpop.permute.xlu0 %417
  %v420 = vsel %vm147, %v416, 0
  %v423 = vsel %vm147, %v418, 0
  %425 = vmatprep.subr.bf16.mxu0 0
  %426 = vmatpush1.bf16.xpose.msra.mxu0 %v423
  %427 = vmatprep.subr.bf16.mxu0 0
  %428 = vmatpush1.bf16.xpose.msra.mxu0 0
  %429 = vmatprep.subr.bf16.mxu0 0
  %430 = vmatpush1.bf16.xpose.msra.mxu0 0
  %431 = vmatprep.subr.bf16.mxu0 0
  %432 = vmatpush1.bf16.xpose.msra.mxu0 0
  %433 = vmatprep.subr.bf16.mxu0 0
  %434 = vmatpush1.bf16.xpose.msra.mxu0 0
  %435 = vmatprep.subr.bf16.mxu0 0
  %436 = vmatpush1.bf16.xpose.msra.mxu0 0
  %437 = vmatprep.subr.bf16.mxu0 0
  %438 = vmatpush1.bf16.xpose.msra.mxu0 0
  %439 = vmatprep.subr.bf16.mxu0 0
  %440 = vmatpush1.bf16.xpose.msra.mxu0 0
  %441 = vmatprep.subr.bf16.mxu0 0
  %442 = vmatpush1.bf16.xpose.msra.mxu0 0
  %443 = vmatprep.subr.bf16.mxu0 0
  %444 = vmatpush1.bf16.xpose.msra.mxu0 0
  %445 = vmatprep.subr.bf16.mxu0 0
  %446 = vmatpush1.bf16.xpose.msra.mxu0 0
  %447 = vmatprep.subr.bf16.mxu0 0
  %448 = vmatpush1.bf16.xpose.msra.mxu0 0
  %449 = vmatprep.subr.bf16.mxu0 0
  %450 = vmatpush1.bf16.xpose.msra.mxu0 0
  %451 = vmatprep.subr.bf16.mxu0 0
  %452 = vmatpush1.bf16.xpose.msra.mxu0 0
  %453 = vmatprep.subr.bf16.mxu0 0
  %454 = vmatpush1.bf16.xpose.msra.mxu0 0
  %455 = vmatprep.subr.bf16.mxu0 0
  %456 = vmatpush1.bf16.xpose.msra.mxu0 0
  %457 = vmatprep.mubr.bf16.mxu0 0
  %458 = vmatmul.mubr.bf16.gmra.mrb[0].mxu0 %v420
  %v459 = vpop.f32.mrb[0].mxu0
  %v460 = vadd.f32 %v137, %v459
  %v461 = vpop.f32.mrb[0].mxu0
  %v462 = vpop.f32.mrb[0].mxu0
  %v463 = vpop.f32.mrb[0].mxu0
  %464 = vdwg.mxu0
  %v465 = vsel %vm147, %v410, -inf
  %466 = vmax.xlane.f32.xlu0 %v465
  %v467 = vpop.xlane.xlu0 %466
  %v468 = vsel %vm147, %v460, -inf
  %469 = vmax.xlane.f32.xlu0 %v468
  %v470 = vpop.xlane.xlu0 %469
  %v471 = vsub.f32 %v410, %v467
  %v472 = vsub.f32 %v460, %v470
  %v473 = vmul.f32 %v471, 1.442695
  %v474 = vpow.pop %v473
  %v475 = vmul.f32 %v472, 1.442695
  %v476 = vpow.pop %v475
  %v477 = vsel %vm147, %v474, 0.0
  %478 = vadd.xlane.f32.xlu0 %v477
  %v479 = vpop.xlane.xlu0 %478
  %v480 = vsel %vm147, %v476, 0.0
  %481 = vadd.xlane.f32.xlu0 %v480
  %v482 = vpop.xlane.xlu0 %481
  %v483 = vrcp.pop %v479
  %v484 = vrcp.pop %v482
  %v485 = vmul.f32 %v474, %v483
  %v486 = vmul.f32 %v476, %v484
  %v487 = vpack.c.bf16 %v485, %v485
  %v488 = vpack.c.bf16 %v486, %v486
  %489 = vrot.lane.b32.xlu0 %v142, 56
  %v490 = vpop.permute.xlu0 %489
  %v492 = vsel %vm147, %v487, 0
  %v495 = vsel %vm272, %v490, 0
  %497 = vmatprep.subr.bf16.mxu0 0
  %498 = vmatpush1.bf16.msra.mxu0 %v495
  %499 = vmatprep.subr.bf16.mxu0 0
  %500 = vmatpush1.bf16.msra.mxu0 0
  %501 = vmatprep.subr.bf16.mxu0 0
  %502 = vmatpush1.bf16.msra.mxu0 0
  %503 = vmatprep.subr.bf16.mxu0 0
  %504 = vmatpush1.bf16.msra.mxu0 0
  %505 = vmatprep.subr.bf16.mxu0 0
  %506 = vmatpush1.bf16.msra.mxu0 0
  %507 = vmatprep.subr.bf16.mxu0 0
  %508 = vmatpush1.bf16.msra.mxu0 0
  %509 = vmatprep.subr.bf16.mxu0 0
  %510 = vmatpush1.bf16.msra.mxu0 0
  %511 = vmatprep.subr.bf16.mxu0 0
  %512 = vmatpush1.bf16.msra.mxu0 0
  %513 = vmatprep.subr.bf16.mxu0 0
  %514 = vmatpush1.bf16.msra.mxu0 0
  %515 = vmatprep.subr.bf16.mxu0 0
  %516 = vmatpush1.bf16.msra.mxu0 0
  %517 = vmatprep.subr.bf16.mxu0 0
  %518 = vmatpush1.bf16.msra.mxu0 0
  %519 = vmatprep.subr.bf16.mxu0 0
  %520 = vmatpush1.bf16.msra.mxu0 0
  %521 = vmatprep.subr.bf16.mxu0 0
  %522 = vmatpush1.bf16.msra.mxu0 0
  %523 = vmatprep.subr.bf16.mxu0 0
  %524 = vmatpush1.bf16.msra.mxu0 0
  %525 = vmatprep.subr.bf16.mxu0 0
  %526 = vmatpush1.bf16.msra.mxu0 0
  %527 = vmatprep.subr.bf16.mxu0 0
  %528 = vmatpush1.bf16.msra.mxu0 0
  %529 = vmatprep.mubr.bf16.mxu0 0
  %530 = vmatmul.mubr.bf16.gmra.mrb[0].mxu0 %v492
  %v531 = vpop.f32.mrb[0].mxu0
  %v532 = vadd.f32 0.0, %v531
  %v533 = vpop.f32.mrb[0].mxu0
  %v534 = vpop.f32.mrb[0].mxu0
  %v535 = vpop.f32.mrb[0].mxu0
  %536 = vdwg.mxu0
  %537 = vrot.lane.b32.xlu0 %v143, 56
  %v538 = vpop.permute.xlu0 %537
  %v540 = vsel %vm147, %v488, 0
  %v543 = vsel %vm272, %v538, 0
  %545 = vmatprep.subr.bf16.mxu0 0
  %546 = vmatpush1.bf16.msra.mxu0 %v543
  %547 = vmatprep.subr.bf16.mxu0 0
  %548 = vmatpush1.bf16.msra.mxu0 0
  %549 = vmatprep.subr.bf16.mxu0 0
  %550 = vmatpush1.bf16.msra.mxu0 0
  %551 = vmatprep.subr.bf16.mxu0 0
  %552 = vmatpush1.bf16.msra.mxu0 0
  %553 = vmatprep.subr.bf16.mxu0 0
  %554 = vmatpush1.bf16.msra.mxu0 0
  %555 = vmatprep.subr.bf16.mxu0 0
  %556 = vmatpush1.bf16.msra.mxu0 0
  %557 = vmatprep.subr.bf16.mxu0 0
  %558 = vmatpush1.bf16.msra.mxu0 0
  %559 = vmatprep.subr.bf16.mxu0 0
  %560 = vmatpush1.bf16.msra.mxu0 0
  %561 = vmatprep.subr.bf16.mxu0 0
  %562 = vmatpush1.bf16.msra.mxu0 0
  %563 = vmatprep.subr.bf16.mxu0 0
  %564 = vmatpush1.bf16.msra.mxu0 0
  %565 = vmatprep.subr.bf16.mxu0 0
  %566 = vmatpush1.bf16.msra.mxu0 0
  %567 = vmatprep.subr.bf16.mxu0 0
  %568 = vmatpush1.bf16.msra.mxu0 0
  %569 = vmatprep.subr.bf16.mxu0 0
  %570 = vmatpush1.bf16.msra.mxu0 0
  %571 = vmatprep.subr.bf16.mxu0 0
  %572 = vmatpush1.bf16.msra.mxu0 0
  %573 = vmatprep.subr.bf16.mxu0 0
  %574 = vmatpush1.bf16.msra.mxu0 0
  %575 = vmatprep.subr.bf16.mxu0 0
  %576 = vmatpush1.bf16.msra.mxu0 0
  %577 = vmatprep.mubr.bf16.mxu0 0
  %578 = vmatmul.mubr.bf16.gmra.mrb[0].mxu0 %v540
  %v579 = vpop.f32.mrb[0].mxu0
  %v580 = vadd.f32 0.0, %v579
  %v581 = vpop.f32.mrb[0].mxu0
  %v582 = vpop.f32.mrb[0].mxu0
  %v583 = vpop.f32.mrb[0].mxu0
  %584 = vdwg.mxu0
  %v585 = vpack.c.bf16 %v580, %v532
  %v587 = vsel %vm147, %v585, 0
  %v590 = vsel %vm272, %v139, 0
  %592 = vmatprep.subr.bf16.mxu0 0
  %593 = vmatpush1.bf16.msra.mxu0 %v590
  %594 = vmatprep.subr.bf16.mxu0 0
  %595 = vmatpush1.bf16.msra.mxu0 0
  %596 = vmatprep.subr.bf16.mxu0 0
  %597 = vmatpush1.bf16.msra.mxu0 0
  %598 = vmatprep.subr.bf16.mxu0 0
  %599 = vmatpush1.bf16.msra.mxu0 0
  %600 = vmatprep.subr.bf16.mxu0 0
  %601 = vmatpush1.bf16.msra.mxu0 0
  %602 = vmatprep.subr.bf16.mxu0 0
  %603 = vmatpush1.bf16.msra.mxu0 0
  %604 = vmatprep.subr.bf16.mxu0 0
  %605 = vmatpush1.bf16.msra.mxu0 0
  %606 = vmatprep.subr.bf16.mxu0 0
  %607 = vmatpush1.bf16.msra.mxu0 0
  %608 = vmatprep.subr.bf16.mxu0 0
  %609 = vmatpush1.bf16.msra.mxu0 0
  %610 = vmatprep.subr.bf16.mxu0 0
  %611 = vmatpush1.bf16.msra.mxu0 0
  %612 = vmatprep.subr.bf16.mxu0 0
  %613 = vmatpush1.bf16.msra.mxu0 0
  %614 = vmatprep.subr.bf16.mxu0 0
  %615 = vmatpush1.bf16.msra.mxu0 0
  %616 = vmatprep.subr.bf16.mxu0 0
  %617 = vmatpush1.bf16.msra.mxu0 0
  %618 = vmatprep.subr.bf16.mxu0 0
  %619 = vmatpush1.bf16.msra.mxu0 0
  %620 = vmatprep.subr.bf16.mxu0 0
  %621 = vmatpush1.bf16.msra.mxu0 0
  %622 = vmatprep.subr.bf16.mxu0 0
  %623 = vmatpush1.bf16.msra.mxu0 0
  %624 = vmatprep.mubr.bf16.mxu0 0
  %625 = vmatmul.mubr.bf16.gmra.mrb[0].mxu0 %v587
  %v626 = vpop.f32.mrb[0].mxu0
  %v627 = vadd.f32 0.0, %v626
  %v628 = vpop.f32.mrb[0].mxu0
  %v629 = vpop.f32.mrb[0].mxu0
  %v630 = vadd.f32 0.0, %v629
  %v631 = vpop.f32.mrb[0].mxu0
  %632 = vdwg.mxu0
  %v634 = vsel %vm147, %v364, 0
  %v637 = vsel %vm272, %v138, 0
  %639 = vmatprep.subr.bf16.mxu0 0
  %640 = vmatpush1.bf16.msra.mxu0 %v637
  %641 = vmatprep.subr.bf16.mxu0 0
  %642 = vmatpush1.bf16.msra.mxu0 0
  %643 = vmatprep.subr.bf16.mxu0 0
  %644 = vmatpush1.bf16.msra.mxu0 0
  %645 = vmatprep.subr.bf16.mxu0 0
  %646 = vmatpush1.bf16.msra.mxu0 0
  %647 = vmatprep.subr.bf16.mxu0 0
  %648 = vmatpush1.bf16.msra.mxu0 0
  %649 = vmatprep.subr.bf16.mxu0 0
  %650 = vmatpush1.bf16.msra.mxu0 0
  %651 = vmatprep.subr.bf16.mxu0 0
  %652 = vmatpush1.bf16.msra.mxu0 0
  %653 = vmatprep.subr.bf16.mxu0 0
  %654 = vmatpush1.bf16.msra.mxu0 0
  %655 = vmatprep.subr.bf16.mxu0 0
  %656 = vmatpush1.bf16.msra.mxu0 0
  %657 = vmatprep.subr.bf16.mxu0 0
  %658 = vmatpush1.bf16.msra.mxu0 0
  %659 = vmatprep.subr.bf16.mxu0 0
  %660 = vmatpush1.bf16.msra.mxu0 0
  %661 = vmatprep.subr.bf16.mxu0 0
  %662 = vmatpush1.bf16.msra.mxu0 0
  %663 = vmatprep.subr.bf16.mxu0 0
  %664 = vmatpush1.bf16.msra.mxu0 0
  %665 = vmatprep.subr.bf16.mxu0 0
  %666 = vmatpush1.bf16.msra.mxu0 0
  %667 = vmatprep.subr.bf16.mxu0 0
  %668 = vmatpush1.bf16.msra.mxu0 0
  %669 = vmatprep.subr.bf16.mxu0 0
  %670 = vmatpush1.bf16.msra.mxu0 0
  %671 = vmatprep.mubr.bf16.mxu0 0
  %672 = vmatmul.mubr.bf16.gmra.mrb[0].mxu0 %v634
  %v673 = vpop.f32.mrb[0].mxu0
  %v674 = vadd.f32 %v627, %v673
  %v675 = vpop.f32.mrb[0].mxu0
  %v676 = vpop.f32.mrb[0].mxu0
  %v677 = vadd.f32 %v630, %v676
  %v678 = vpop.f32.mrb[0].mxu0
  %679 = vdwg.mxu0
  %680 = vrot.lane.b32.xlu0 %v142, 112
  %v681 = vpop.permute.xlu0 %680
  %682 = vrot.lane.b32.xlu0 %v142, 80
  %v683 = vpop.permute.xlu0 %682
  %v685 = vsel %vm147, %v681, 0
  %v688 = vsel %vm147, %v683, 0
  %690 = vmatprep.subr.bf16.mxu0 0
  %691 = vmatpush1.bf16.xpose.msra.mxu0 %v688
  %692 = vmatprep.subr.bf16.mxu0 0
  %693 = vmatpush1.bf16.xpose.msra.mxu0 0
  %694 = vmatprep.subr.bf16.mxu0 0
  %695 = vmatpush1.bf16.xpose.msra.mxu0 0
  %696 = vmatprep.subr.bf16.mxu0 0
  %697 = vmatpush1.bf16.xpose.msra.mxu0 0
  %698 = vmatprep.subr.bf16.mxu0 0
  %699 = vmatpush1.bf16.xpose.msra.mxu0 0
  %700 = vmatprep.subr.bf16.mxu0 0
  %701 = vmatpush1.bf16.xpose.msra.mxu0 0
  %702 = vmatprep.subr.bf16.mxu0 0
  %703 = vmatpush1.bf16.xpose.msra.mxu0 0
  %704 = vmatprep.subr.bf16.mxu0 0
  %705 = vmatpush1.bf16.xpose.msra.mxu0 0
  %706 = vmatprep.subr.bf16.mxu0 0
  %707 = vmatpush1.bf16.xpose.msra.mxu0 0
  %708 = vmatprep.subr.bf16.mxu0 0
  %709 = vmatpush1.bf16.xpose.msra.mxu0 0
  %710 = vmatprep.subr.bf16.mxu0 0
  %711 = vmatpush1.bf16.xpose.msra.mxu0 0
  %712 = vmatprep.subr.bf16.mxu0 0
  %713 = vmatpush1.bf16.xpose.msra.mxu0 0
  %714 = vmatprep.subr.bf16.mxu0 0
  %715 = vmatpush1.bf16.xpose.msra.mxu0 0
  %716 = vmatprep.subr.bf16.mxu0 0
  %717 = vmatpush1.bf16.xpose.msra.mxu0 0
  %718 = vmatprep.subr.bf16.mxu0 0
  %719 = vmatpush1.bf16.xpose.msra.mxu0 0
  %720 = vmatprep.subr.bf16.mxu0 0
  %721 = vmatpush1.bf16.xpose.msra.mxu0 0
  %722 = vmatprep.mubr.bf16.mxu0 0
  %723 = vmatmul.mubr.bf16.gmra.mrb[0].mxu0 %v685
  %v724 = vpop.f32.mrb[0].mxu0
  %v725 = vadd.f32 %v137, %v724
  %v726 = vpop.f32.mrb[0].mxu0
  %v727 = vpop.f32.mrb[0].mxu0
  %v728 = vpop.f32.mrb[0].mxu0
  %729 = vdwg.mxu0
  %730 = vrot.lane.b32.xlu0 %v143, 112
  %v731 = vpop.permute.xlu0 %730
  %732 = vrot.lane.b32.xlu0 %v143, 80
  %v733 = vpop.permute.xlu0 %732
  %v735 = vsel %vm147, %v731, 0
  %v738 = vsel %vm147, %v733, 0
  %740 = vmatprep.subr.bf16.mxu0 0
  %741 = vmatpush1.bf16.xpose.msra.mxu0 %v738
  %742 = vmatprep.subr.bf16.mxu0 0
  %743 = vmatpush1.bf16.xpose.msra.mxu0 0
  %744 = vmatprep.subr.bf16.mxu0 0
  %745 = vmatpush1.bf16.xpose.msra.mxu0 0
  %746 = vmatprep.subr.bf16.mxu0 0
  %747 = vmatpush1.bf16.xpose.msra.mxu0 0
  %748 = vmatprep.subr.bf16.mxu0 0
  %749 = vmatpush1.bf16.xpose.msra.mxu0 0
  %750 = vmatprep.subr.bf16.mxu0 0
  %751 = vmatpush1.bf16.xpose.msra.mxu0 0
  %752 = vmatprep.subr.bf16.mxu0 0
  %753 = vmatpush1.bf16.xpose.msra.mxu0 0
  %754 = vmatprep.subr.bf16.mxu0 0
  %755 = vmatpush1.bf16.xpose.msra.mxu0 0
  %756 = vmatprep.subr.bf16.mxu0 0
  %757 = vmatpush1.bf16.xpose.msra.mxu0 0
  %758 = vmatprep.subr.bf16.mxu0 0
  %759 = vmatpush1.bf16.xpose.msra.mxu0 0
  %760 = vmatprep.subr.bf16.mxu0 0
  %761 = vmatpush1.bf16.xpose.msra.mxu0 0
  %762 = vmatprep.subr.bf16.mxu0 0
  %763 = vmatpush1.bf16.xpose.msra.mxu0 0
  %764 = vmatprep.subr.bf16.mxu0 0
  %765 = vmatpush1.bf16.xpose.msra.mxu0 0
  %766 = vmatprep.subr.bf16.mxu0 0
  %767 = vmatpush1.bf16.xpose.msra.mxu0 0
  %768 = vmatprep.subr.bf16.mxu0 0
  %769 = vmatpush1.bf16.xpose.msra.mxu0 0
  %770 = vmatprep.subr.bf16.mxu0 0
  %771 = vmatpush1.bf16.xpose.msra.mxu0 0
  %772 = vmatprep.mubr.bf16.mxu0 0
  %773 = vmatmul.mubr.bf16.gmra.mrb[0].mxu0 %v735
  %v774 = vpop.f32.mrb[0].mxu0
  %v775 = vadd.f32 %v137, %v774
  %v776 = vpop.f32.mrb[0].mxu0
  %v777 = vpop.f32.mrb[0].mxu0
  %v778 = vpop.f32.mrb[0].mxu0
  %779 = vdwg.mxu0
  %v780 = vsel %vm147, %v725, -inf
  %781 = vmax.xlane.f32.xlu0 %v780
  %v782 = vpop.xlane.xlu0 %781
  %v783 = vsel %vm147, %v775, -inf
  %784 = vmax.xlane.f32.xlu0 %v783
  %v785 = vpop.xlane.xlu0 %784
  %v786 = vsub.f32 %v725, %v782
  %v787 = vsub.f32 %v775, %v785
  %v788 = vmul.f32 %v786, 1.442695
  %v789 = vpow.pop %v788
  %v790 = vmul.f32 %v787, 1.442695
  %v791 = vpow.pop %v790
  %v792 = vsel %vm147, %v789, 0.0
  %793 = vadd.xlane.f32.xlu0 %v792
  %v794 = vpop.xlane.xlu0 %793
  %v795 = vsel %vm147, %v791, 0.0
  %796 = vadd.xlane.f32.xlu0 %v795
  %v797 = vpop.xlane.xlu0 %796
  %v798 = vrcp.pop %v794
  %v799 = vrcp.pop %v797
  %v800 = vmul.f32 %v789, %v798
  %v801 = vmul.f32 %v791, %v799
  %v802 = vpack.c.bf16 %v800, %v800
  %v803 = vpack.c.bf16 %v801, %v801
  %804 = vrot.lane.b32.xlu0 %v142, 48
  %v805 = vpop.permute.xlu0 %804
  %v807 = vsel %vm147, %v802, 0
  %v810 = vsel %vm272, %v805, 0
  %812 = vmatprep.subr.bf16.mxu0 0
  %813 = vmatpush1.bf16.msra.mxu0 %v810
  %814 = vmatprep.subr.bf16.mxu0 0
  %815 = vmatpush1.bf16.msra.mxu0 0
  %816 = vmatprep.subr.bf16.mxu0 0
  %817 = vmatpush1.bf16.msra.mxu0 0
  %818 = vmatprep.subr.bf16.mxu0 0
  %819 = vmatpush1.bf16.msra.mxu0 0
  %820 = vmatprep.subr.bf16.mxu0 0
  %821 = vmatpush1.bf16.msra.mxu0 0
  %822 = vmatprep.subr.bf16.mxu0 0
  %823 = vmatpush1.bf16.msra.mxu0 0
  %824 = vmatprep.subr.bf16.mxu0 0
  %825 = vmatpush1.bf16.msra.mxu0 0
  %826 = vmatprep.subr.bf16.mxu0 0
  %827 = vmatpush1.bf16.msra.mxu0 0
  %828 = vmatprep.subr.bf16.mxu0 0
  %829 = vmatpush1.bf16.msra.mxu0 0
  %830 = vmatprep.subr.bf16.mxu0 0
  %831 = vmatpush1.bf16.msra.mxu0 0
  %832 = vmatprep.subr.bf16.mxu0 0
  %833 = vmatpush1.bf16.msra.mxu0 0
  %834 = vmatprep.subr.bf16.mxu0 0
  %835 = vmatpush1.bf16.msra.mxu0 0
  %836 = vmatprep.subr.bf16.mxu0 0
  %837 = vmatpush1.bf16.msra.mxu0 0
  %838 = vmatprep.subr.bf16.mxu0 0
  %839 = vmatpush1.bf16.msra.mxu0 0
  %840 = vmatprep.subr.bf16.mxu0 0
  %841 = vmatpush1.bf16.msra.mxu0 0
  %842 = vmatprep.subr.bf16.mxu0 0
  %843 = vmatpush1.bf16.msra.mxu0 0
  %844 = vmatprep.mubr.bf16.mxu0 0
  %845 = vmatmul.mubr.bf16.gmra.mrb[0].mxu0 %v807
  %v846 = vpop.f32.mrb[0].mxu0
  %v847 = vadd.f32 0.0, %v846
  %v848 = vpop.f32.mrb[0].mxu0
  %v849 = vpop.f32.mrb[0].mxu0
  %v850 = vpop.f32.mrb[0].mxu0
  %851 = vdwg.mxu0
  %852 = vrot.lane.b32.xlu0 %v143, 48
  %v853 = vpop.permute.xlu0 %852
  %v855 = vsel %vm147, %v803, 0
  %v858 = vsel %vm272, %v853, 0
  %860 = vmatprep.subr.bf16.mxu0 0
  %861 = vmatpush1.bf16.msra.mxu0 %v858
  %862 = vmatprep.subr.bf16.mxu0 0
  %863 = vmatpush1.bf16.msra.mxu0 0
  %864 = vmatprep.subr.bf16.mxu0 0
  %865 = vmatpush1.bf16.msra.mxu0 0
  %866 = vmatprep.subr.bf16.mxu0 0
  %867 = vmatpush1.bf16.msra.mxu0 0
  %868 = vmatprep.subr.bf16.mxu0 0
  %869 = vmatpush1.bf16.msra.mxu0 0
  %870 = vmatprep.subr.bf16.mxu0 0
  %871 = vmatpush1.bf16.msra.mxu0 0
  %872 = vmatprep.subr.bf16.mxu0 0
  %873 = vmatpush1.bf16.msra.mxu0 0
  %874 = vmatprep.subr.bf16.mxu0 0
  %875 = vmatpush1.bf16.msra.mxu0 0
  %876 = vmatprep.subr.bf16.mxu0 0
  %877 = vmatpush1.bf16.msra.mxu0 0
  %878 = vmatprep.subr.bf16.mxu0 0
  %879 = vmatpush1.bf16.msra.mxu0 0
  %880 = vmatprep.subr.bf16.mxu0 0
  %881 = vmatpush1.bf16.msra.mxu0 0
  %882 = vmatprep.subr.bf16.mxu0 0
  %883 = vmatpush1.bf16.msra.mxu0 0
  %884 = vmatprep.subr.bf16.mxu0 0
  %885 = vmatpush1.bf16.msra.mxu0 0
  %886 = vmatprep.subr.bf16.mxu0 0
  %887 = vmatpush1.bf16.msra.mxu0 0
  %888 = vmatprep.subr.bf16.mxu0 0
  %889 = vmatpush1.bf16.msra.mxu0 0
  %890 = vmatprep.subr.bf16.mxu0 0
  %891 = vmatpush1.bf16.msra.mxu0 0
  %892 = vmatprep.mubr.bf16.mxu0 0
  %893 = vmatmul.mubr.bf16.gmra.mrb[0].mxu0 %v855
  %v894 = vpop.f32.mrb[0].mxu0
  %v895 = vadd.f32 0.0, %v894
  %v896 = vpop.f32.mrb[0].mxu0
  %v897 = vpop.f32.mrb[0].mxu0
  %v898 = vpop.f32.mrb[0].mxu0
  %899 = vdwg.mxu0
  %v900 = vpack.c.bf16 %v895, %v847
  %v902 = vsel %vm147, %v900, 0
  %v905 = vsel %vm272, %v140, 0
  %907 = vmatprep.subr.bf16.mxu0 0
  %908 = vmatpush1.bf16.msra.mxu0 %v905
  %909 = vmatprep.subr.bf16.mxu0 0
  %910 = vmatpush1.bf16.msra.mxu0 0
  %911 = vmatprep.subr.bf16.mxu0 0
  %912 = vmatpush1.bf16.msra.mxu0 0
  %913 = vmatprep.subr.bf16.mxu0 0
  %914 = vmatpush1.bf16.msra.mxu0 0
  %915 = vmatprep.subr.bf16.mxu0 0
  %916 = vmatpush1.bf16.msra.mxu0 0
  %917 = vmatprep.subr.bf16.mxu0 0
  %918 = vmatpush1.bf16.msra.mxu0 0
  %919 = vmatprep.subr.bf16.mxu0 0
  %920 = vmatpush1.bf16.msra.mxu0 0
  %921 = vmatprep.subr.bf16.mxu0 0
  %922 = vmatpush1.bf16.msra.mxu0 0
  %923 = vmatprep.subr.bf16.mxu0 0
  %924 = vmatpush1.bf16.msra.mxu0 0
  %925 = vmatprep.subr.bf16.mxu0 0
  %926 = vmatpush1.bf16.msra.mxu0 0
  %927 = vmatprep.subr.bf16.mxu0 0
  %928 = vmatpush1.bf16.msra.mxu0 0
  %929 = vmatprep.subr.bf16.mxu0 0
  %930 = vmatpush1.bf16.msra.mxu0 0
  %931 = vmatprep.subr.bf16.mxu0 0
  %932 = vmatpush1.bf16.msra.mxu0 0
  %933 = vmatprep.subr.bf16.mxu0 0
  %934 = vmatpush1.bf16.msra.mxu0 0
  %935 = vmatprep.subr.bf16.mxu0 0
  %936 = vmatpush1.bf16.msra.mxu0 0
  %937 = vmatprep.subr.bf16.mxu0 0
  %938 = vmatpush1.bf16.msra.mxu0 0
  %939 = vmatprep.mubr.bf16.mxu0 0
  %940 = vmatmul.mubr.bf16.gmra.mrb[0].mxu0 %v902
  %v941 = vpop.f32.mrb[0].mxu0
  %v942 = vadd.f32 0.0, %v941
  %v943 = vpop.f32.mrb[0].mxu0
  %v944 = vpop.f32.mrb[0].mxu0
  %v945 = vadd.f32 0.0, %v944
  %v946 = vpop.f32.mrb[0].mxu0
  %947 = vdwg.mxu0
  %v948 = vadd.f32 %v674, %v942
  %v949 = vadd.f32 %v677, %v945
  %950 = vrot.lane.b32.xlu0 %v142, 104
  %v951 = vpop.permute.xlu0 %950
  %952 = vrot.lane.b32.xlu0 %v142, 72
  %v953 = vpop.permute.xlu0 %952
  %v955 = vsel %vm147, %v951, 0
  %v958 = vsel %vm147, %v953, 0
  %960 = vmatprep.subr.bf16.mxu0 0
  %961 = vmatpush1.bf16.xpose.msra.mxu0 %v958
  %962 = vmatprep.subr.bf16.mxu0 0
  %963 = vmatpush1.bf16.xpose.msra.mxu0 0
  %964 = vmatprep.subr.bf16.mxu0 0
  %965 = vmatpush1.bf16.xpose.msra.mxu0 0
  %966 = vmatprep.subr.bf16.mxu0 0
  %967 = vmatpush1.bf16.xpose.msra.mxu0 0
  %968 = vmatprep.subr.bf16.mxu0 0
  %969 = vmatpush1.bf16.xpose.msra.mxu0 0
  %970 = vmatprep.subr.bf16.mxu0 0
  %971 = vmatpush1.bf16.xpose.msra.mxu0 0
  %972 = vmatprep.subr.bf16.mxu0 0
  %973 = vmatpush1.bf16.xpose.msra.mxu0 0
  %974 = vmatprep.subr.bf16.mxu0 0
  %975 = vmatpush1.bf16.xpose.msra.mxu0 0
  %976 = vmatprep.subr.bf16.mxu0 0
  %977 = vmatpush1.bf16.xpose.msra.mxu0 0
  %978 = vmatprep.subr.bf16.mxu0 0
  %979 = vmatpush1.bf16.xpose.msra.mxu0 0
  %980 = vmatprep.subr.bf16.mxu0 0
  %981 = vmatpush1.bf16.xpose.msra.mxu0 0
  %982 = vmatprep.subr.bf16.mxu0 0
  %983 = vmatpush1.bf16.xpose.msra.mxu0 0
  %984 = vmatprep.subr.bf16.mxu0 0
  %985 = vmatpush1.bf16.xpose.msra.mxu0 0
  %986 = vmatprep.subr.bf16.mxu0 0
  %987 = vmatpush1.bf16.xpose.msra.mxu0 0
  %988 = vmatprep.subr.bf16.mxu0 0
  %989 = vmatpush1.bf16.xpose.msra.mxu0 0
  %990 = vmatprep.subr.bf16.mxu0 0
  %991 = vmatpush1.bf16.xpose.msra.mxu0 0
  %992 = vmatprep.mubr.bf16.mxu0 0
  %993 = vmatmul.mubr.bf16.gmra.mrb[0].mxu0 %v955
  %v994 = vpop.f32.mrb[0].mxu0
  %v995 = vadd.f32 %v137, %v994
  %v996 = vpop.f32.mrb[0].mxu0
  %v997 = vpop.f32.mrb[0].mxu0
  %v998 = vpop.f32.mrb[0].mxu0
  %999 = vdwg.mxu0
  %1000 = vrot.lane.b32.xlu0 %v143, 104
  %v1001 = vpop.permute.xlu0 %1000
  %1002 = vrot.lane.b32.xlu0 %v143, 72
  %v1003 = vpop.permute.xlu0 %1002
  %v1005 = vsel %vm147, %v1001, 0
  %v1008 = vsel %vm147, %v1003, 0
  %1010 = vmatprep.subr.bf16.mxu0 0
  %1011 = vmatpush1.bf16.xpose.msra.mxu0 %v1008
  %1012 = vmatprep.subr.bf16.mxu0 0
  %1013 = vmatpush1.bf16.xpose.msra.mxu0 0
  %1014 = vmatprep.subr.bf16.mxu0 0
  %1015 = vmatpush1.bf16.xpose.msra.mxu0 0
  %1016 = vmatprep.subr.bf16.mxu0 0
  %1017 = vmatpush1.bf16.xpose.msra.mxu0 0
  %1018 = vmatprep.subr.bf16.mxu0 0
  %1019 = vmatpush1.bf16.xpose.msra.mxu0 0
  %1020 = vmatprep.subr.bf16.mxu0 0
  %1021 = vmatpush1.bf16.xpose.msra.mxu0 0
  %1022 = vmatprep.subr.bf16.mxu0 0
  %1023 = vmatpush1.bf16.xpose.msra.mxu0 0
  %1024 = vmatprep.subr.bf16.mxu0 0
  %1025 = vmatpush1.bf16.xpose.msra.mxu0 0
  %1026 = vmatprep.subr.bf16.mxu0 0
  %1027 = vmatpush1.bf16.xpose.msra.mxu0 0
  %1028 = vmatprep.subr.bf16.mxu0 0
  %1029 = vmatpush1.bf16.xpose.msra.mxu0 0
  %1030 = vmatprep.subr.bf16.mxu0 0
  %1031 = vmatpush1.bf16.xpose.msra.mxu0 0
  %1032 = vmatprep.subr.bf16.mxu0 0
  %1033 = vmatpush1.bf16.xpose.msra.mxu0 0
  %1034 = vmatprep.subr.bf16.mxu0 0
  %1035 = vmatpush1.bf16.xpose.msra.mxu0 0
  %1036 = vmatprep.subr.bf16.mxu0 0
  %1037 = vmatpush1.bf16.xpose.msra.mxu0 0
  %1038 = vmatprep.subr.bf16.mxu0 0
  %1039 = vmatpush1.bf16.xpose.msra.mxu0 0
  %1040 = vmatprep.subr.bf16.mxu0 0
  %1041 = vmatpush1.bf16.xpose.msra.mxu0 0
  %1042 = vmatprep.mubr.bf16.mxu0 0
  %1043 = vmatmul.mubr.bf16.gmra.mrb[0].mxu0 %v1005
  %v1044 = vpop.f32.mrb[0].mxu0
  %v1045 = vadd.f32 %v137, %v1044
  %v1046 = vpop.f32.mrb[0].mxu0
  %v1047 = vpop.f32.mrb[0].mxu0
  %v1048 = vpop.f32.mrb[0].mxu0
  %1049 = vdwg.mxu0
  %v1050 = vsel %vm147, %v995, -inf
  %1051 = vmax.xlane.f32.xlu0 %v1050
  %v1052 = vpop.xlane.xlu0 %1051
  %v1053 = vsel %vm147, %v1045, -inf
  %1054 = vmax.xlane.f32.xlu0 %v1053
  %v1055 = vpop.xlane.xlu0 %1054
  %v1056 = vsub.f32 %v995, %v1052
  %v1057 = vsub.f32 %v1045, %v1055
  %v1058 = vmul.f32 %v1056, 1.442695
  %v1059 = vpow.pop %v1058
  %v1060 = vmul.f32 %v1057, 1.442695
  %v1061 = vpow.pop %v1060
  %v1062 = vsel %vm147, %v1059, 0.0
  %1063 = vadd.xlane.f32.xlu0 %v1062
  %v1064 = vpop.xlane.xlu0 %1063
  %v1065 = vsel %vm147, %v1061, 0.0
  %1066 = vadd.xlane.f32.xlu0 %v1065
  %v1067 = vpop.xlane.xlu0 %1066
  %v1068 = vrcp.pop %v1064
  %v1069 = vrcp.pop %v1067
  %v1070 = vmul.f32 %v1059, %v1068
  %v1071 = vmul.f32 %v1061, %v1069
  %v1072 = vpack.c.bf16 %v1070, %v1070
  %v1073 = vpack.c.bf16 %v1071, %v1071
  %1074 = vrot.lane.b32.xlu0 %v142, 40
  %v1075 = vpop.permute.xlu0 %1074
  %v1077 = vsel %vm147, %v1072, 0
  %v1080 = vsel %vm272, %v1075, 0
  %1082 = vmatprep.subr.bf16.mxu0 0
  %1083 = vmatpush1.bf16.msra.mxu0 %v1080
  %1084 = vmatprep.subr.bf16.mxu0 0
  %1085 = vmatpush1.bf16.msra.mxu0 0
  %1086 = vmatprep.subr.bf16.mxu0 0
  %1087 = vmatpush1.bf16.msra.mxu0 0
  %1088 = vmatprep.subr.bf16.mxu0 0
  %1089 = vmatpush1.bf16.msra.mxu0 0
  %1090 = vmatprep.subr.bf16.mxu0 0
  %1091 = vmatpush1.bf16.msra.mxu0 0
  %1092 = vmatprep.subr.bf16.mxu0 0
  %1093 = vmatpush1.bf16.msra.mxu0 0
  %1094 = vmatprep.subr.bf16.mxu0 0
  %1095 = vmatpush1.bf16.msra.mxu0 0
  %1096 = vmatprep.subr.bf16.mxu0 0
  %1097 = vmatpush1.bf16.msra.mxu0 0
  %1098 = vmatprep.subr.bf16.mxu0 0
  %1099 = vmatpush1.bf16.msra.mxu0 0
  %1100 = vmatprep.subr.bf16.mxu0 0
  %1101 = vmatpush1.bf16.msra.mxu0 0
  %1102 = vmatprep.subr.bf16.mxu0 0
  %1103 = vmatpush1.bf16.msra.mxu0 0
  %1104 = vmatprep.subr.bf16.mxu0 0
  %1105 = vmatpush1.bf16.msra.mxu0 0
  %1106 = vmatprep.subr.bf16.mxu0 0
  %1107 = vmatpush1.bf16.msra.mxu0 0
  %1108 = vmatprep.subr.bf16.mxu0 0
  %1109 = vmatpush1.bf16.msra.mxu0 0
  %1110 = vmatprep.subr.bf16.mxu0 0
  %1111 = vmatpush1.bf16.msra.mxu0 0
  %1112 = vmatprep.subr.bf16.mxu0 0
  %1113 = vmatpush1.bf16.msra.mxu0 0
  %1114 = vmatprep.mubr.bf16.mxu0 0
  %1115 = vmatmul.mubr.bf16.gmra.mrb[0].mxu0 %v1077
  %v1116 = vpop.f32.mrb[0].mxu0
  %v1117 = vadd.f32 0.0, %v1116
  %v1118 = vpop.f32.mrb[0].mxu0
  %v1119 = vpop.f32.mrb[0].mxu0
  %v1120 = vpop.f32.mrb[0].mxu0
  %1121 = vdwg.mxu0
  %1122 = vrot.lane.b32.xlu0 %v143, 40
  %v1123 = vpop.permute.xlu0 %1122
  %v1125 = vsel %vm147, %v1073, 0
  %v1128 = vsel %vm272, %v1123, 0
  %1130 = vmatprep.subr.bf16.mxu0 0
  %1131 = vmatpush1.bf16.msra.mxu0 %v1128
  %1132 = vmatprep.subr.bf16.mxu0 0
  %1133 = vmatpush1.bf16.msra.mxu0 0
  %1134 = vmatprep.subr.bf16.mxu0 0
  %1135 = vmatpush1.bf16.msra.mxu0 0
  %1136 = vmatprep.subr.bf16.mxu0 0
  %1137 = vmatpush1.bf16.msra.mxu0 0
  %1138 = vmatprep.subr.bf16.mxu0 0
  %1139 = vmatpush1.bf16.msra.mxu0 0
  %1140 = vmatprep.subr.bf16.mxu0 0
  %1141 = vmatpush1.bf16.msra.mxu0 0
  %1142 = vmatprep.subr.bf16.mxu0 0
  %1143 = vmatpush1.bf16.msra.mxu0 0
  %1144 = vmatprep.subr.bf16.mxu0 0
  %1145 = vmatpush1.bf16.msra.mxu0 0
  %1146 = vmatprep.subr.bf16.mxu0 0
  %1147 = vmatpush1.bf16.msra.mxu0 0
  %1148 = vmatprep.subr.bf16.mxu0 0
  %1149 = vmatpush1.bf16.msra.mxu0 0
  %1150 = vmatprep.subr.bf16.mxu0 0
  %1151 = vmatpush1.bf16.msra.mxu0 0
  %1152 = vmatprep.subr.bf16.mxu0 0
  %1153 = vmatpush1.bf16.msra.mxu0 0
  %1154 = vmatprep.subr.bf16.mxu0 0
  %1155 = vmatpush1.bf16.msra.mxu0 0
  %1156 = vmatprep.subr.bf16.mxu0 0
  %1157 = vmatpush1.bf16.msra.mxu0 0
  %1158 = vmatprep.subr.bf16.mxu0 0
  %1159 = vmatpush1.bf16.msra.mxu0 0
  %1160 = vmatprep.subr.bf16.mxu0 0
  %1161 = vmatpush1.bf16.msra.mxu0 0
  %1162 = vmatprep.mubr.bf16.mxu0 0
  %1163 = vmatmul.mubr.bf16.gmra.mrb[0].mxu0 %v1125
  %v1164 = vpop.f32.mrb[0].mxu0
  %v1165 = vadd.f32 0.0, %v1164
  %v1166 = vpop.f32.mrb[0].mxu0
  %v1167 = vpop.f32.mrb[0].mxu0
  %v1168 = vpop.f32.mrb[0].mxu0
  %1169 = vdwg.mxu0
  %v1170 = vpack.c.bf16 %v1165, %v1117
  %v1172 = vsel %vm147, %v1170, 0
  %v1175 = vsel %vm272, %v141, 0
  %1177 = vmatprep.subr.bf16.mxu0 0
  %1178 = vmatpush1.bf16.msra.mxu0 %v1175
  %1179 = vmatprep.subr.bf16.mxu0 0
  %1180 = vmatpush1.bf16.msra.mxu0 0
  %1181 = vmatprep.subr.bf16.mxu0 0
  %1182 = vmatpush1.bf16.msra.mxu0 0
  %1183 = vmatprep.subr.bf16.mxu0 0
  %1184 = vmatpush1.bf16.msra.mxu0 0
  %1185 = vmatprep.subr.bf16.mxu0 0
  %1186 = vmatpush1.bf16.msra.mxu0 0
  %1187 = vmatprep.subr.bf16.mxu0 0
  %1188 = vmatpush1.bf16.msra.mxu0 0
  %1189 = vmatprep.subr.bf16.mxu0 0
  %1190 = vmatpush1.bf16.msra.mxu0 0
  %1191 = vmatprep.subr.bf16.mxu0 0
  %1192 = vmatpush1.bf16.msra.mxu0 0
  %1193 = vmatprep.subr.bf16.mxu0 0
  %1194 = vmatpush1.bf16.msra.mxu0 0
  %1195 = vmatprep.subr.bf16.mxu0 0
  %1196 = vmatpush1.bf16.msra.mxu0 0
  %1197 = vmatprep.subr.bf16.mxu0 0
  %1198 = vmatpush1.bf16.msra.mxu0 0
  %1199 = vmatprep.subr.bf16.mxu0 0
  %1200 = vmatpush1.bf16.msra.mxu0 0
  %1201 = vmatprep.subr.bf16.mxu0 0
  %1202 = vmatpush1.bf16.msra.mxu0 0
  %1203 = vmatprep.subr.bf16.mxu0 0
  %1204 = vmatpush1.bf16.msra.mxu0 0
  %1205 = vmatprep.subr.bf16.mxu0 0
  %1206 = vmatpush1.bf16.msra.mxu0 0
  %1207 = vmatprep.subr.bf16.mxu0 0
  %1208 = vmatpush1.bf16.msra.mxu0 0
  %1209 = vmatprep.mubr.bf16.mxu0 0
  %1210 = vmatmul.mubr.bf16.gmra.mrb[0].mxu0 %v1172
  %v1211 = vpop.f32.mrb[0].mxu0
  %v1212 = vadd.f32 0.0, %v1211
  %v1213 = vpop.f32.mrb[0].mxu0
  %v1214 = vpop.f32.mrb[0].mxu0
  %v1215 = vadd.f32 0.0, %v1214
  %v1216 = vpop.f32.mrb[0].mxu0
  %1217 = vdwg.mxu0
  %v1218 = vadd.f32 %v948, %v1212
  %v1219 = vadd.f32 %v949, %v1215
  %v1220 = vlaneseq
  %v1221 = vshrl.u32 %v1220, 7
  %v1222 = vsub.s32 4, %v1221
  %v1223 = vrot.slane %v26, %v1222
  %v1224 = vadd.f32 %v1218, %v1223
  %v1225 = vadd.f32 %v1219, %v1223
  %v1226 = vadd.f32 %v24, %v1224
  %v1227 = vadd.f32 %v25, %v1225
  %v1228 = vsel %vm27, %v1226, 0.0
  %1229 = vadd.xlane.f32.xlu0 %v1228
  %v1230 = vpop.xlane.xlu0 %1229
  %v1231 = vsel %vm27, %v1227, 0.0
  %1232 = vadd.xlane.f32.xlu0 %v1231
  %v1233 = vpop.xlane.xlu0 %1232
  %v1234 = vmul.f32 %v1230, %v34
  %v1235 = vmul.f32 %v1233, %v34
  %v1236 = vsub.f32 %v1226, %v1234
  %v1237 = vsub.f32 %v1227, %v1235
  %v1238 = vmul.f32 %v1236, %v1236
  %v1239 = vmul.f32 %v1237, %v1237
  %v1240 = vsel %vm27, %v1238, 0.0
  %1241 = vadd.xlane.f32.xlu0 %v1240
  %v1242 = vpop.xlane.xlu0 %1241
  %v1243 = vsel %vm27, %v1239, 0.0
  %1244 = vadd.xlane.f32.xlu0 %v1243
  %v1245 = vpop.xlane.xlu0 %1244
  %v1246 = vmul.f32 %v1242, %v34
  %v1247 = vmul.f32 %v1245, %v34
  %v1248 = vadd.f32 %v1246, 1e-05
  %v1249 = vadd.f32 %v1247, 1e-05
  %v1250 = vrsqrt.pop %v1248
  %v1251 = vrsqrt.pop %v1249
  %v1252 = vmul.f32 %v1236, %v1250
  %v1253 = vmul.f32 %v1237, %v1251
  %v1254 = vlaneseq
  %v1255 = vshrl.u32 %v1254, 7
  %v1256 = vsub.s32 2, %v1255
  %v1257 = vrot.slane %v26, %v1256
  %v1258 = vmul.f32 %v1252, %v1257
  %v1259 = vmul.f32 %v1253, %v1257
  %v1260 = vlaneseq
  %v1261 = vshrl.u32 %v1260, 7
  %v1262 = vsub.s32 3, %v1261
  %v1263 = vrot.slane %v26, %v1262
  %v1264 = vadd.f32 %v1258, %v1263
  %v1265 = vadd.f32 %v1259, %v1263
  %v1266 = vpack.c.bf16 %v1265, %v1264
  %v1267 = vld [vmem:[%s4] sm:$0xf]
  %v1268 = vld [vmem:[%s4 + $0x4] sm:$0xf]
  %v1269 = vld [vmem:[%s4 + $0x8] sm:$0xf]
  %v1270 = vld [vmem:[%s4 + $0xc] sm:$0xf]
  %v1271 = vlaneseq
  %v1272 = vshrl.u32 %v1271, 7
  %v1273 = vsub.s32 6, %v1272
  %v1274 = vrot.slane %v26, %v1273
  %v1279 = vunpack.c.l.b16 %v1267
  %v1280 = vunpack.c.l.b16 %v1268
  %v1281 = vunpack.c.l.b16 %v1269
  %v1282 = vunpack.c.l.b16 %v1270
  %v1283 = vpack.c.b16 %v1280, %v1279
  %v1284 = vpack.c.b16 %v1282, %v1281
  %v1288 = vsel %vm27, %v1266, 0
  %1290 = vmatprep.subr.bf16.mxu0 0
  %1291 = vmatpush1.bf16.msra.mxu0 %v1283
  %1292 = vmatprep.subr.bf16.mxu0 0
  %1293 = vmatpush1.bf16.msra.mxu0 %v1284
  %1294 = vmatprep.subr.bf16.mxu0 0
  %1295 = vmatpush1.bf16.msra.mxu0 0
  %1296 = vmatprep.subr.bf16.mxu0 0
  %1297 = vmatpush1.bf16.msra.mxu0 0
  %1298 = vmatprep.subr.bf16.mxu0 0
  %1299 = vmatpush1.bf16.msra.mxu0 0
  %1300 = vmatprep.subr.bf16.mxu0 0
  %1301 = vmatpush1.bf16.msra.mxu0 0
  %1302 = vmatprep.subr.bf16.mxu0 0
  %1303 = vmatpush1.bf16.msra.mxu0 0
  %1304 = vmatprep.subr.bf16.mxu0 0
  %1305 = vmatpush1.bf16.msra.mxu0 0
  %1306 = vmatprep.subr.bf16.mxu0 0
  %1307 = vmatpush1.bf16.msra.mxu0 0
  %1308 = vmatprep.subr.bf16.mxu0 0
  %1309 = vmatpush1.bf16.msra.mxu0 0
  %1310 = vmatprep.subr.bf16.mxu0 0
  %1311 = vmatpush1.bf16.msra.mxu0 0
  %1312 = vmatprep.subr.bf16.mxu0 0
  %1313 = vmatpush1.bf16.msra.mxu0 0
  %1314 = vmatprep.subr.bf16.mxu0 0
  %1315 = vmatpush1.bf16.msra.mxu0 0
  %1316 = vmatprep.subr.bf16.mxu0 0
  %1317 = vmatpush1.bf16.msra.mxu0 0
  %1318 = vmatprep.subr.bf16.mxu0 0
  %1319 = vmatpush1.bf16.msra.mxu0 0
  %1320 = vmatprep.subr.bf16.mxu0 0
  %1321 = vmatpush1.bf16.msra.mxu0 0
  %1322 = vmatprep.mubr.bf16.mxu0 0
  %1323 = vmatmul.mubr.bf16.gmra.mrb[0].mxu0 %v1288
  %v1324 = vpop.f32.mrb[0].mxu0
  %v1325 = vadd.f32 %v1274, %v1324
  %v1326 = vpop.f32.mrb[0].mxu0
  %v1327 = vpop.f32.mrb[0].mxu0
  %v1328 = vadd.f32 %v1274, %v1327
  %v1329 = vpop.f32.mrb[0].mxu0
  %1330 = vdwg.mxu0
  %v1331 = vmul.f32 %v1325, 0.5
  %v1332 = vmul.f32 %v1328, 0.5
  %v1333 = vmul.f32 %v1325, 0.044715
  %v1334 = vmul.f32 %v1328, 0.044715
  %v1335 = vmul.f32 %v1333, %v1325
  %v1336 = vmul.f32 %v1334, %v1328
  %v1337 = vmul.f32 %v1335, %v1325
  %v1338 = vmul.f32 %v1336, %v1328
  %v1339 = vadd.f32 %v1325, %v1337
  %v1340 = vadd.f32 %v1328, %v1338
  %v1341 = vmul.f32 %v1339, 0.7978846
  %v1342 = vmul.f32 %v1340, 0.7978846
  %v1343 = vtanh.pop %v1341
  %v1344 = vtanh.pop %v1342
  %v1345 = vadd.f32 %v1343, 1.0
  %v1346 = vadd.f32 %v1344, 1.0
  %v1347 = vmul.f32 %v1331, %v1345
  %v1348 = vmul.f32 %v1332, %v1346
  %v1349 = vpack.c.bf16 %v1348, %v1347
  %v1350 = vld [vmem:[%s5] sm:$0xf]
  %v1351 = vld [vmem:[%s5 + $0x4] sm:$0xf]
  %v1352 = vld [vmem:[%s5 + $0x8] sm:$0xf]
  %v1353 = vld [vmem:[%s5 + $0xc] sm:$0xf]
  %v1354 = vld [vmem:[%s5 + $0x10] sm:$0xf]
  %v1355 = vld [vmem:[%s5 + $0x14] sm:$0xf]
  %v1356 = vld [vmem:[%s5 + $0x18] sm:$0xf]
  %v1357 = vld [vmem:[%s5 + $0x1c] sm:$0xf]
  %v1358 = vld [vmem:[%s5 + $0x20] sm:$0xf]
  %v1359 = vld [vmem:[%s5 + $0x24] sm:$0xf]
  %v1360 = vld [vmem:[%s5 + $0x28] sm:$0xf]
  %v1361 = vld [vmem:[%s5 + $0x2c] sm:$0xf]
  %v1362 = vld [vmem:[%s5 + $0x30] sm:$0xf]
  %v1363 = vld [vmem:[%s5 + $0x34] sm:$0xf]
  %v1364 = vld [vmem:[%s5 + $0x38] sm:$0xf]
  %v1365 = vld [vmem:[%s5 + $0x3c] sm:$0xf]
  %v1366 = vlaneseq
  %v1367 = vshrl.u32 %v1366, 7
  %v1368 = vsub.s32 5, %v1367
  %v1369 = vrot.slane %v26, %v1368
  %v1386 = vunpack.c.l.b16 %v1350
  %v1387 = vunpack.c.l.b16 %v1351
  %v1388 = vunpack.c.l.b16 %v1352
  %v1389 = vunpack.c.l.b16 %v1353
  %v1390 = vunpack.c.l.b16 %v1354
  %v1391 = vunpack.c.l.b16 %v1355
  %v1392 = vunpack.c.l.b16 %v1356
  %v1393 = vunpack.c.l.b16 %v1357
  %v1394 = vunpack.c.l.b16 %v1358
  %v1395 = vunpack.c.l.b16 %v1359
  %v1396 = vunpack.c.l.b16 %v1360
  %v1397 = vunpack.c.l.b16 %v1361
  %v1398 = vunpack.c.l.b16 %v1362
  %v1399 = vunpack.c.l.b16 %v1363
  %v1400 = vunpack.c.l.b16 %v1364
  %v1401 = vunpack.c.l.b16 %v1365
  %v1402 = vpack.c.b16 %v1387, %v1386
  %v1403 = vpack.c.b16 %v1389, %v1388
  %v1404 = vpack.c.b16 %v1391, %v1390
  %v1405 = vpack.c.b16 %v1393, %v1392
  %v1406 = vpack.c.b16 %v1395, %v1394
  %v1407 = vpack.c.b16 %v1397, %v1396
  %v1408 = vpack.c.b16 %v1399, %v1398
  %v1409 = vpack.c.b16 %v1401, %v1400
  %1418 = vmatprep.subr.bf16.mxu0 0
  %1419 = vmatpush1.bf16.msra.mxu0 %v1402
  %1420 = vmatprep.subr.bf16.mxu0 0
  %1421 = vmatpush1.bf16.msra.mxu0 %v1403
  %1422 = vmatprep.subr.bf16.mxu0 0
  %1423 = vmatpush1.bf16.msra.mxu0 %v1404
  %1424 = vmatprep.subr.bf16.mxu0 0
  %1425 = vmatpush1.bf16.msra.mxu0 %v1405
  %1426 = vmatprep.subr.bf16.mxu0 0
  %1427 = vmatpush1.bf16.msra.mxu0 %v1406
  %1428 = vmatprep.subr.bf16.mxu0 0
  %1429 = vmatpush1.bf16.msra.mxu0 %v1407
  %1430 = vmatprep.subr.bf16.mxu0 0
  %1431 = vmatpush1.bf16.msra.mxu0 %v1408
  %1432 = vmatprep.subr.bf16.mxu0 0
  %1433 = vmatpush1.bf16.msra.mxu0 %v1409
  %1434 = vmatprep.subr.bf16.mxu0 0
  %1435 = vmatpush1.bf16.msra.mxu0 0
  %1436 = vmatprep.subr.bf16.mxu0 0
  %1437 = vmatpush1.bf16.msra.mxu0 0
  %1438 = vmatprep.subr.bf16.mxu0 0
  %1439 = vmatpush1.bf16.msra.mxu0 0
  %1440 = vmatprep.subr.bf16.mxu0 0
  %1441 = vmatpush1.bf16.msra.mxu0 0
  %1442 = vmatprep.subr.bf16.mxu0 0
  %1443 = vmatpush1.bf16.msra.mxu0 0
  %1444 = vmatprep.subr.bf16.mxu0 0
  %1445 = vmatpush1.bf16.msra.mxu0 0
  %1446 = vmatprep.subr.bf16.mxu0 0
  %1447 = vmatpush1.bf16.msra.mxu0 0
  %1448 = vmatprep.subr.bf16.mxu0 0
  %1449 = vmatpush1.bf16.msra.mxu0 0
  %1450 = vmatprep.mubr.bf16.mxu0 0
  %1451 = vmatmul.mubr.bf16.gmra.mrb[0].mxu0 %v1349
  %v1452 = vpop.f32.mrb[0].mxu0
  %v1453 = vadd.f32 %v1369, %v1452
  %v1454 = vpop.f32.mrb[0].mxu0
  %v1455 = vpop.f32.mrb[0].mxu0
  %v1456 = vadd.f32 %v1369, %v1455
  %v1457 = vpop.f32.mrb[0].mxu0
  %1458 = vdwg.mxu0
  %v1459 = vadd.f32 %v1226, %v1453
  %v1460 = vadd.f32 %v1227, %v1456
  %v1461 = vsel %vm27, %v1459, %v126
  %v1462 = vsel %vm27, %v1460, %v129
  %vm1463 = vcmask 523264
  %v1464 = vsel %vm1463, %v1461, %v126
  %v1465 = vsel %vm1463, %v1462, %v129
  %vm1466 = vcmask 785408
  %v1467 = vsel %vm1466, %v1464, 0.0
  %v1468 = vsel %vm1466, %v1465, 0.0
  %1469 = vst [vmem:[%s6] sm:$0xff] %v1467
  %1470 = vst [vmem:[%s6 + $0x8] sm:$0xff] %v1468
  // Predicated region
  $region26: #{gpt2_block.1} parent=0 // pred_check
    _
  $region27: #{gpt2_block.1} parent=0 // pred_check_branch
    %1472 = sbr.rel (0) target = $region29
  $region28: #{gpt2_block.1} parent=0 // pred_region
    _
  $region29: #{gpt2_block.1} parent=0 // pred_fallthru
    _
  // Predicated region
  $region30: #{gpt2_block.1} parent=0 // pred_check
    _
  $region31: #{gpt2_block.1} parent=0 // pred_check_branch
    %1474 = sbr.rel (0) target = $region33
  $region32: #{gpt2_block.1} parent=0 // pred_region
    _
  $region33: #{gpt2_block.1} parent=0 // pred_fallthru
    _

</llo_original>
